<compile_context>
chip_gen: v7x
topology: tpu7x:2x2x1
jax: 0.10.0
libtpu: 0.0.40
codegen_flags: <defaults>
</compile_context>

<pallas_src>
import jax
import jax.numpy as jnp
from jax.experimental import pallas as pl
from jax.experimental.pallas import tpu as pltpu

_LANE = 128
_NEG = -1e30  # gating-logit pad for non-existent expert lanes (kept in f32 bias)


def _pick_tm(T, Dg, Din, Dout_p, in_bytes, out_bytes, vmem_budget):
    """Token-tile size from a VMEM budget: double-buffered activation/output
    tiles + f32 accumulator/gates scratch per token row, plus resident weights."""
    fixed = 2 * (Dg * _LANE * 2 + _LANE * 4 + Din * Dout_p * 2 + Dout_p * 4) \
        + 8 * _LANE * 4
    per_row = (2 * (Dg + Din) * in_bytes        # gating + branch input tiles
               + 2 * Dout_p * out_bytes          # output tile
               + Dout_p * 4 + _LANE * 4)         # f32 accumulator + gates scratch
    tm = max(vmem_budget - fixed, per_row) // per_row
    tm = max(_LANE, min(1024, (tm // _LANE) * _LANE))
    tm = min(tm, max(_LANE, -(-T // _LANE) * _LANE))   # no bigger than needed
    return int(tm)


def moe_layer_forward(gating_input, branch_input, params, *, tm=None,
                      out_dtype=None, vmem_budget=24 * 1024 * 1024):
    """gating_input: (B, S, Dg), branch_input: (B, S, Din).
    params: wg (Dg, E), bg (E,), we (E, Din, Dout), be (E, Dout).
    Returns (final_output (B, S, Dout), aux_loss scalar)."""
    wg, bg, we, be = params["wg"], params["bg"], params["we"], params["be"]
    B, S, Dg = gating_input.shape
    Din = branch_input.shape[-1]
    E, _, Dout = we.shape
    assert E <= _LANE, "more than 128 experts not supported by this kernel"
    T = B * S
    Dout_p = -(-Dout // _LANE) * _LANE            # lane-aligned expert width
    out_dtype = branch_input.dtype if out_dtype is None else out_dtype

    # ---- activations: flatten only; no host pad, no dtype cast (the bf16 cast
    # happens in-kernel so the kernel streams the tensors at native dtype). ----
    xg = gating_input.reshape(T, Dg)
    x = branch_input.reshape(T, Din)

    # ---- weights: one-time prep ----------------------------------------------
    # gating weight lane-padded to 128 and cast to bf16 (MXU); bias stays f32
    # with -1e30 pads so padded expert lanes softmax to exactly 0.
    wg_p = jnp.pad(wg, ((0, 0), (0, _LANE - E))).astype(jnp.bfloat16)
    bg_p = jnp.concatenate(
        [bg.reshape(1, E).astype(jnp.float32),
         jnp.full((1, _LANE - E), _NEG, jnp.float32)], axis=1)
    # experts concatenated along N as (Din, E*Dout_p), bf16; the grid walks one
    # lane-aligned (Din, Dout_p) expert tile at a time (VMEM bounded in E*Dout).
    wcat = jnp.transpose(we, (1, 0, 2))           # (Din, E, Dout)
    be_p = be
    if Dout_p != Dout:
        wcat = jnp.pad(wcat, ((0, 0), (0, 0), (0, Dout_p - Dout)))
        be_p = jnp.pad(be, ((0, 0), (0, Dout_p - Dout)))
    wcat = wcat.reshape(Din, E * Dout_p).astype(jnp.bfloat16)
    bcat = be_p.reshape(1, E * Dout_p).astype(jnp.float32)

    if tm is None:
        tm = _pick_tm(T, Dg, Din, Dout_p, jnp.dtype(x.dtype).itemsize,
                      jnp.dtype(out_dtype).itemsize, vmem_budget)
    num_tiles = -(-T // tm)

    # ---- kernel ----------------------------------------------------------------
    def kernel(xg_ref, x_ref, wg_ref, bg_ref, wcat_ref, bcat_ref,
               out_ref, gsum_ref, gates_sc, acc_sc):
        i = pl.program_id(0)                      # token tile (parallel)
        j = pl.program_id(1)                      # expert (arbitrary, innermost)

        # gating + aux gate sums once per token tile
        @pl.when(j == 0)
        def _():
            logits = jnp.dot(xg_ref[...].astype(jnp.bfloat16), wg_ref[...],
                             preferred_element_type=jnp.float32) + bg_ref[...]
            m = jnp.max(logits, axis=-1, keepdims=True)
            p = jnp.exp(logits - m)
            gates = p / jnp.sum(p, axis=-1, keepdims=True)   # exact division
            gates_sc[...] = gates

            # per-expert probability sums for the aux loss; tail mask only on
            # the (possibly ragged) last token tile.  jnp.where is NaN-safe
            # w.r.t. whatever the padded tail rows contain.
            @pl.when(i != pl.num_programs(0) - 1)
            def _():
                gsum_ref[...] = jnp.broadcast_to(
                    jnp.sum(gates, axis=0, keepdims=True), (8, _LANE))

            @pl.when(i == pl.num_programs(0) - 1)
            def _():
                row = (jax.lax.broadcasted_iota(jnp.int32, (tm, _LANE), 0)
                       + i * tm)
                g = jnp.where(row < T, gates, 0.0)
                gsum_ref[...] = jnp.broadcast_to(
                    jnp.sum(g, axis=0, keepdims=True), (8, _LANE))

        # expert j: one bf16 MXU matmul over its lane-aligned weight tile
        eo = jnp.dot(x_ref[...].astype(jnp.bfloat16), wcat_ref[...],
                     preferred_element_type=jnp.float32) + bcat_ref[...]

        # gate column j -> (tm, 1): lane one-hot select + cross-lane (XLU) reduce
        lane = jax.lax.broadcasted_iota(jnp.int32, (tm, _LANE), 1)
        g_j = jnp.sum(jnp.where(lane == j, gates_sc[...], 0.0),
                      axis=-1, keepdims=True)
        part = g_j * eo

        @pl.when(j == 0)
        def _():
            acc_sc[...] = part

        @pl.when(j > 0)
        def _():
            acc_sc[...] += part

        # single lane-dense store per token tile
        @pl.when(j == pl.num_programs(1) - 1)
        def _():
            out_ref[...] = acc_sc[...].astype(out_ref.dtype)

    out, gsum = pl.pallas_call(
        kernel,
        out_shape=(
            jax.ShapeDtypeStruct((T, Dout_p), out_dtype),
            jax.ShapeDtypeStruct((num_tiles * 8, _LANE), jnp.float32),
        ),
        grid_spec=pltpu.PrefetchScalarGridSpec(
            num_scalar_prefetch=0,
            grid=(num_tiles, E),
            in_specs=[
                pl.BlockSpec((tm, Dg), lambda i, j: (i, 0)),        # gating in
                pl.BlockSpec((tm, Din), lambda i, j: (i, 0)),       # branch in
                pl.BlockSpec((Dg, _LANE), lambda i, j: (0, 0)),     # gating W
                pl.BlockSpec((1, _LANE), lambda i, j: (0, 0)),      # gating b
                pl.BlockSpec((Din, Dout_p), lambda i, j: (0, j)),   # expert W tile
                pl.BlockSpec((1, Dout_p), lambda i, j: (0, j)),     # expert b tile
            ],
            out_specs=[
                pl.BlockSpec((tm, Dout_p), lambda i, j: (i, 0)),
                pl.BlockSpec((8, _LANE), lambda i, j: (i, 0)),
            ],
            scratch_shapes=[
                pltpu.VMEM((tm, _LANE), jnp.float32),     # gates (per token tile)
                pltpu.VMEM((tm, Dout_p), jnp.float32),    # combine accumulator
            ],
        ),
        compiler_params=pltpu.CompilerParams(
            dimension_semantics=("parallel", "arbitrary"),
            vmem_limit_bytes=48 * 1024 * 1024),
    )(xg, x, wg_p, bg_p, wcat, bcat)

    # aux load-balancing loss: tiny reduction over E floats
    gate_sums = jnp.sum(gsum, axis=0) / 8.0       # (128,), sublane-replicated
    mean_prob = gate_sums[:E] / T                 # (E,)
    aux_loss = E * jnp.sum(mean_prob * mean_prob)

    final = out[:, :Dout] if Dout_p != Dout else out
    return final.reshape(B, S, Dout), aux_loss


def _reference(gating_input, branch_input, params, *, matmul_dtype=jnp.float32):
    """Pure-JAX reference of MoELayer.forward.  matmul_dtype lets the check
    mirror the kernel's bf16 MXU operands exactly (f32 accumulation)."""
    wg, bg, we, be = params["wg"], params["bg"], params["we"], params["be"]
    c = lambda a: a.astype(matmul_dtype).astype(jnp.float32)
    logits = jnp.einsum("bsd,de->bse", c(gating_input), c(wg)) + bg
    gates = jax.nn.softmax(logits, axis=-1)                          # (B,S,E)
    expert_outs = jnp.einsum("bsd,edo->bseo", c(branch_input), c(we)) + be[None, None]
    final = jnp.sum(expert_outs * gates[..., None], axis=-2)
    mean_prob = jnp.mean(gates.reshape(-1, gates.shape[-1]), axis=0)
    aux = gates.shape[-1] * jnp.sum(mean_prob * mean_prob)
    return final, aux


if __name__ == "__main__":
    # T = 200 tokens with tm=128 exercises multi-tile + ragged-tail masking;
    # Dout = 128 keeps the output store lane-dense; E = 4 experts.
    B, S = 2, 100
    Dg, Din, Dout, E = 64, 64, 128, 4

    key = jax.random.PRNGKey(0)
    k1, k2, k3, k4, k5, k6 = jax.random.split(key, 6)
    params = {
        "wg": jax.random.normal(k1, (Dg, E), jnp.float32) * 0.1,
        "bg": jax.random.normal(k2, (E,), jnp.float32) * 0.1,
        "we": jax.random.normal(k3, (E, Din, Dout), jnp.float32) * 0.1,
        "be": jax.random.normal(k4, (E, Dout), jnp.float32) * 0.1,
    }
    gating_input = jax.random.normal(k5, (B, S, Dg), jnp.float32)
    branch_input = jax.random.normal(k6, (B, S, Din), jnp.float32)

    out, aux = moe_layer_forward(gating_input, branch_input, params, tm=128)
    out, aux = jax.block_until_ready((out, aux))

    # tight check vs. a reference that mirrors the kernel's bf16 MXU operands
    ref_out, ref_aux = _reference(gating_input, branch_input, params,
                                  matmul_dtype=jnp.bfloat16)
    assert out.shape == ref_out.shape
    assert jnp.allclose(out, ref_out, atol=3e-3, rtol=3e-3), (
        float(jnp.max(jnp.abs(out - ref_out))))
    assert jnp.allclose(aux, ref_aux, atol=3e-3, rtol=3e-3), (
        float(aux), float(ref_aux))

    # sanity check vs. full-f32 module semantics (headroom for bf16 rounding)
    ref_out32, ref_aux32 = _reference(gating_input, branch_input, params)
    assert jnp.allclose(out, ref_out32, atol=5e-2, rtol=5e-2), (
        float(jnp.max(jnp.abs(out - ref_out32))))
    assert jnp.allclose(aux, ref_aux32, atol=5e-2, rtol=5e-2), (
        float(aux), float(ref_aux32))

    print("KERNEL_OK")
</pallas_src>

<mosaic_0001>
module attributes {stable_mosaic.version = 11 : i64} {
  func.func @kernel(%arg0: i32, %arg1: i32, %arg2: memref<128x64xf32, #tpu.memory_space<vmem>>, %arg3: memref<128x64xf32, #tpu.memory_space<vmem>>, %arg4: memref<64x128xbf16, #tpu.memory_space<vmem>>, %arg5: memref<1x128xf32, #tpu.memory_space<vmem>>, %arg6: memref<64x128xbf16, #tpu.memory_space<vmem>>, %arg7: memref<1x128xf32, #tpu.memory_space<vmem>>, %arg8: memref<128x128xf32, #tpu.memory_space<vmem>>, %arg9: memref<8x128xf32, #tpu.memory_space<vmem>>, %arg10: memref<128x128xf32, #tpu.memory_space<vmem>>, %arg11: memref<128x128xf32, #tpu.memory_space<vmem>>) attributes {dimension_semantics = [#tpu.dimension_semantics<parallel>, #tpu.dimension_semantics<arbitrary>], iteration_bounds = array<i64: 2, 4>, scalar_prefetch = 0 : i64, scratch_operands = 2 : i64, tpu.core_type = #tpu.core_type<tc>, window_params = [{transform_indices = @transform_0, window_bounds = array<i64: 128, 64>}, {transform_indices = @transform_1, window_bounds = array<i64: 128, 64>}, {pipeline_mode = #tpu.pipeline_mode<synchronous>, transform_indices = @transform_2, window_bounds = array<i64: 64, 128>}, {pipeline_mode = #tpu.pipeline_mode<synchronous>, transform_indices = @transform_3, window_bounds = array<i64: 1, 128>}, {transform_indices = @transform_4, window_bounds = array<i64: 64, 128>}, {transform_indices = @transform_5, window_bounds = array<i64: 1, 128>}, {transform_indices = @transform_6, window_bounds = array<i64: 128, 128>}, {transform_indices = @transform_7, window_bounds = array<i64: 8, 128>}]} {
    %c0_i32 = arith.constant 0 : i32
    %0 = arith.cmpi eq, %arg1, %c0_i32 : i32
    %1 = arith.extui %0 : i1 to i32
    %c0_i32_0 = arith.constant 0 : i32
    %2 = arith.cmpi ne, %1, %c0_i32_0 : i32
    scf.if %2 {
      %c0_15 = arith.constant 0 : index
      %c0_16 = arith.constant 0 : index
      %29 = vector.load %arg2[%c0_15, %c0_16] : memref<128x64xf32, #tpu.memory_space<vmem>>, vector<128x64xf32>
      %30 = arith.truncf %29 : vector<128x64xf32> to vector<128x64xbf16>
      %c0_17 = arith.constant 0 : index
      %c0_18 = arith.constant 0 : index
      %31 = vector.load %arg4[%c0_17, %c0_18] : memref<64x128xbf16, #tpu.memory_space<vmem>>, vector<64x128xbf16>
      %cst_19 = arith.constant dense<0.000000e+00> : vector<128x128xf32>
      %32 = tpu.matmul %30, %31, %cst_19 {dimension_numbers = #tpu.dot_dimension_numbers<[1], [0], [0], [1], [0, 0, 1, 1], [], []>} : vector<128x64xbf16>, vector<64x128xbf16>, vector<128x128xf32> -> vector<128x128xf32>
      %c0_20 = arith.constant 0 : index
      %c0_21 = arith.constant 0 : index
      %33 = vector.load %arg5[%c0_20, %c0_21] : memref<1x128xf32, #tpu.memory_space<vmem>>, vector<1x128xf32>
      %34 = vector.broadcast %33 : vector<1x128xf32> to vector<128x128xf32>
      %35 = arith.addf %32, %34 : vector<128x128xf32>
      %cst_22 = arith.constant dense<0xFF800000> : vector<128xf32>
      %36 = vector.multi_reduction <maximumf>, %35, %cst_22 [1] : vector<128x128xf32> to vector<128xf32>
      %37 = vector.shape_cast %36 : vector<128xf32> to vector<128x1xf32>
      %38 = vector.broadcast %37 : vector<128x1xf32> to vector<128x128xf32>
      %39 = arith.subf %35, %38 : vector<128x128xf32>
      %40 = math.exp %39 : vector<128x128xf32>
      %cst_23 = arith.constant dense<0.000000e+00> : vector<128xf32>
      %41 = vector.multi_reduction <add>, %40, %cst_23 [1] : vector<128x128xf32> to vector<128xf32>
      %42 = vector.shape_cast %41 : vector<128xf32> to vector<128x1xf32>
      %43 = vector.broadcast %42 : vector<128x1xf32> to vector<128x128xf32>
      %44 = arith.divf %40, %43 : vector<128x128xf32>
      %c0_24 = arith.constant 0 : index
      %c0_25 = arith.constant 0 : index
      %45 = vector.load %arg10[%c0_24, %c0_25] : memref<128x128xf32, #tpu.memory_space<vmem>>, vector<128x128xf32>
      tpu.vector_store %arg10[%c0_24, %c0_25], %44 {strides = array<i32>} : memref<128x128xf32, #tpu.memory_space<vmem>>, vector<128x128xf32>,
      %c1_i32 = arith.constant 1 : i32
      %46 = arith.cmpi ne, %arg0, %c1_i32 : i32
      %47 = arith.extui %46 : i1 to i32
      %c0_i32_26 = arith.constant 0 : i32
      %48 = arith.cmpi ne, %47, %c0_i32_26 : i32
      scf.if %48 {
        %cst_29 = arith.constant dense<0.000000e+00> : vector<128xf32>
        %52 = vector.multi_reduction <add>, %44, %cst_29 [0] : vector<128x128xf32> to vector<128xf32>
        %53 = vector.shape_cast %52 : vector<128xf32> to vector<1x128xf32>
        %54 = vector.shape_cast %53 : vector<1x128xf32> to vector<1x128xf32>
        %55 = vector.broadcast %54 : vector<1x128xf32> to vector<8x128xf32>
        %c0_30 = arith.constant 0 : index
        %c0_31 = arith.constant 0 : index
        %56 = vector.load %arg9[%c0_30, %c0_31] : memref<8x128xf32, #tpu.memory_space<vmem>>, vector<8x128xf32>
        tpu.vector_store %arg9[%c0_30, %c0_31], %55 {strides = array<i32>} : memref<8x128xf32, #tpu.memory_space<vmem>>, vector<8x128xf32>,
      } else {
      }
      %c1_i32_27 = arith.constant 1 : i32
      %49 = arith.cmpi eq, %arg0, %c1_i32_27 : i32
      %50 = arith.extui %49 : i1 to i32
      %c0_i32_28 = arith.constant 0 : i32
      %51 = arith.cmpi ne, %50, %c0_i32_28 : i32
      scf.if %51 {
        %52 = tpu.iota {dimensions = array<i32: 0>} : vector<128x128xi32>
        %c128_i32 = arith.constant 128 : i32
        %53 = arith.muli %arg0, %c128_i32 : i32
        %54 = vector.broadcast %53 : i32 to vector<128x128xi32>
        %55 = arith.addi %52, %54 : vector<128x128xi32>
        %c200_i32 = arith.constant 200 : i32
        %56 = vector.broadcast %c200_i32 : i32 to vector<128x128xi32>
        %57 = arith.cmpi slt, %55, %56 : vector<128x128xi32>
        %cst_29 = arith.constant 0.000000e+00 : f32
        %58 = vector.broadcast %cst_29 : f32 to vector<128x128xf32>
        %59 = arith.select %57, %44, %58 : vector<128x128xi1>, vector<128x128xf32>
        %cst_30 = arith.constant dense<0.000000e+00> : vector<128xf32>
        %60 = vector.multi_reduction <add>, %59, %cst_30 [0] : vector<128x128xf32> to vector<128xf32>
        %61 = vector.shape_cast %60 : vector<128xf32> to vector<1x128xf32>
        %62 = vector.shape_cast %61 : vector<1x128xf32> to vector<1x128xf32>
        %63 = vector.broadcast %62 : vector<1x128xf32> to vector<8x128xf32>
        %c0_31 = arith.constant 0 : index
        %c0_32 = arith.constant 0 : index
        %64 = vector.load %arg9[%c0_31, %c0_32] : memref<8x128xf32, #tpu.memory_space<vmem>>, vector<8x128xf32>
        tpu.vector_store %arg9[%c0_31, %c0_32], %63 {strides = array<i32>} : memref<8x128xf32, #tpu.memory_space<vmem>>, vector<8x128xf32>,
      } else {
      }
    } else {
    }
    %c0 = arith.constant 0 : index
    %c0_1 = arith.constant 0 : index
    %3 = vector.load %arg3[%c0, %c0_1] : memref<128x64xf32, #tpu.memory_space<vmem>>, vector<128x64xf32>
    %4 = arith.truncf %3 : vector<128x64xf32> to vector<128x64xbf16>
    %c0_2 = arith.constant 0 : index
    %c0_3 = arith.constant 0 : index
    %5 = vector.load %arg6[%c0_2, %c0_3] : memref<64x128xbf16, #tpu.memory_space<vmem>>, vector<64x128xbf16>
    %cst = arith.constant dense<0.000000e+00> : vector<128x128xf32>
    %6 = tpu.matmul %4, %5, %cst {dimension_numbers = #tpu.dot_dimension_numbers<[1], [0], [0], [1], [0, 0, 1, 1], [], []>} : vector<128x64xbf16>, vector<64x128xbf16>, vector<128x128xf32> -> vector<128x128xf32>
    %c0_4 = arith.constant 0 : index
    %c0_5 = arith.constant 0 : index
    %7 = vector.load %arg7[%c0_4, %c0_5] : memref<1x128xf32, #tpu.memory_space<vmem>>, vector<1x128xf32>
    %8 = vector.broadcast %7 : vector<1x128xf32> to vector<128x128xf32>
    %9 = arith.addf %6, %8 : vector<128x128xf32>
    %10 = tpu.iota {dimensions = array<i32: 1>} : vector<128x128xi32>
    %11 = vector.broadcast %arg1 : i32 to vector<128x128xi32>
    %12 = arith.cmpi eq, %10, %11 : vector<128x128xi32>
    %c0_6 = arith.constant 0 : index
    %c0_7 = arith.constant 0 : index
    %13 = vector.load %arg10[%c0_6, %c0_7] : memref<128x128xf32, #tpu.memory_space<vmem>>, vector<128x128xf32>
    %cst_8 = arith.constant 0.000000e+00 : f32
    %14 = vector.broadcast %cst_8 : f32 to vector<128x128xf32>
    %15 = arith.select %12, %13, %14 : vector<128x128xi1>, vector<128x128xf32>
    %cst_9 = arith.constant dense<0.000000e+00> : vector<128xf32>
    %16 = vector.multi_reduction <add>, %15, %cst_9 [1] : vector<128x128xf32> to vector<128xf32>
    %17 = vector.shape_cast %16 : vector<128xf32> to vector<128x1xf32>
    %18 = vector.broadcast %17 : vector<128x1xf32> to vector<128x128xf32>
    %19 = arith.mulf %18, %9 : vector<128x128xf32>
    %c0_i32_10 = arith.constant 0 : i32
    %20 = arith.cmpi eq, %arg1, %c0_i32_10 : i32
    %21 = arith.extui %20 : i1 to i32
    %c0_i32_11 = arith.constant 0 : i32
    %22 = arith.cmpi ne, %21, %c0_i32_11 : i32
    scf.if %22 {
      %c0_15 = arith.constant 0 : index
      %c0_16 = arith.constant 0 : index
      %29 = vector.load %arg11[%c0_15, %c0_16] : memref<128x128xf32, #tpu.memory_space<vmem>>, vector<128x128xf32>
      tpu.vector_store %arg11[%c0_15, %c0_16], %19 {strides = array<i32>} : memref<128x128xf32, #tpu.memory_space<vmem>>, vector<128x128xf32>,
    } else {
    }
    %c0_i32_12 = arith.constant 0 : i32
    %23 = arith.cmpi sgt, %arg1, %c0_i32_12 : i32
    %24 = arith.extui %23 : i1 to i32
    %c0_i32_13 = arith.constant 0 : i32
    %25 = arith.cmpi ne, %24, %c0_i32_13 : i32
    scf.if %25 {
      %c0_15 = arith.constant 0 : index
      %c0_16 = arith.constant 0 : index
      %29 = vector.load %arg11[%c0_15, %c0_16] : memref<128x128xf32, #tpu.memory_space<vmem>>, vector<128x128xf32>
      %30 = arith.addf %29, %19 : vector<128x128xf32>
      %c0_17 = arith.constant 0 : index
      %c0_18 = arith.constant 0 : index
      %31 = vector.load %arg11[%c0_17, %c0_18] : memref<128x128xf32, #tpu.memory_space<vmem>>, vector<128x128xf32>
      tpu.vector_store %arg11[%c0_17, %c0_18], %30 {strides = array<i32>} : memref<128x128xf32, #tpu.memory_space<vmem>>, vector<128x128xf32>,
    } else {
    }
    %c3_i32 = arith.constant 3 : i32
    %26 = arith.cmpi eq, %arg1, %c3_i32 : i32
    %27 = arith.extui %26 : i1 to i32
    %c0_i32_14 = arith.constant 0 : i32
    %28 = arith.cmpi ne, %27, %c0_i32_14 : i32
    scf.if %28 {
      %c0_15 = arith.constant 0 : index
      %c0_16 = arith.constant 0 : index
      %29 = vector.load %arg11[%c0_15, %c0_16] : memref<128x128xf32, #tpu.memory_space<vmem>>, vector<128x128xf32>
      %c0_17 = arith.constant 0 : index
      %c0_18 = arith.constant 0 : index
      %30 = vector.load %arg8[%c0_17, %c0_18] : memref<128x128xf32, #tpu.memory_space<vmem>>, vector<128x128xf32>
      tpu.vector_store %arg8[%c0_17, %c0_18], %29 {strides = array<i32>} : memref<128x128xf32, #tpu.memory_space<vmem>>, vector<128x128xf32>,
    } else {
    }
    return
  }
  func.func @transform_0(%arg0: i32, %arg1: i32) -> (i32, i32) {
    %c0_i32 = arith.constant 0 : i32
    %c0_i32_0 = arith.constant 0 : i32
    return %arg0, %c0_i32 : i32, i32
  }
  func.func @transform_1(%arg0: i32, %arg1: i32) -> (i32, i32) {
    %c0_i32 = arith.constant 0 : i32
    %c0_i32_0 = arith.constant 0 : i32
    return %arg0, %c0_i32 : i32, i32
  }
  func.func @transform_2(%arg0: i32, %arg1: i32) -> (i32, i32) {
    %c0_i32 = arith.constant 0 : i32
    %c0_i32_0 = arith.constant 0 : i32
    %c0_i32_1 = arith.constant 0 : i32
    return %c0_i32, %c0_i32_0 : i32, i32
  }
  func.func @transform_3(%arg0: i32, %arg1: i32) -> (i32, i32) {
    %c0_i32 = arith.constant 0 : i32
    %c0_i32_0 = arith.constant 0 : i32
    %c0_i32_1 = arith.constant 0 : i32
    return %c0_i32, %c0_i32_0 : i32, i32
  }
  func.func @transform_4(%arg0: i32, %arg1: i32) -> (i32, i32) {
    %c0_i32 = arith.constant 0 : i32
    %c0_i32_0 = arith.constant 0 : i32
    return %c0_i32, %arg1 : i32, i32
  }
  func.func @transform_5(%arg0: i32, %arg1: i32) -> (i32, i32) {
    %c0_i32 = arith.constant 0 : i32
    %c0_i32_0 = arith.constant 0 : i32
    return %c0_i32, %arg1 : i32, i32
  }
  func.func @transform_6(%arg0: i32, %arg1: i32) -> (i32, i32) {
    %c0_i32 = arith.constant 0 : i32
    %c0_i32_0 = arith.constant 0 : i32
    return %arg0, %c0_i32 : i32, i32
  }
  func.func @transform_7(%arg0: i32, %arg1: i32) -> (i32, i32) {
    %c0_i32 = arith.constant 0 : i32
    %c0_i32_0 = arith.constant 0 : i32
    return %arg0, %c0_i32 : i32, i32
  }
}

</mosaic_0001>

<llo_original>
// kernel: tpu_custom_call.1
$region0: #{tpu_custom_call.1}
  #allocation0 [shape = 'u32[]', space=smem, size = 0x4, offset = 0x4, fixed_abs, tag = 'smem constant byte address 0x4 - core index']
  #allocation1 [shape = 'u32[144,128]{1,0:T(1,128)}', space=vmem, size = 0x12000, scoped, tag = 'internal scratch']
  #allocation2 [shape = 'f32[128,128]{1,0:T(8,128)}', space=vmem, size = 0x10000, scoped, tag = 'scratch operand']
  #allocation3 [shape = 'f32[128,128]{1,0:T(8,128)}', space=vmem, size = 0x10000, scoped, tag = 'scratch operand']
  %s0 = inlined_call_operand.vmem [shape: f32[200,64], index: 0, kind: input, shape index: {}]
  %s1 = inlined_call_operand.vmem [shape: f32[200,64], index: 1, kind: input, shape index: {}]
  %s2 = inlined_call_operand.vmem [shape: bf16[64,128], index: 2, kind: input, shape index: {}]
  %s3 = inlined_call_operand.vmem [shape: f32[1,128], index: 3, kind: input, shape index: {}]
  %s4 = inlined_call_operand.vmem [shape: bf16[64,512], index: 4, kind: input, shape index: {}]
  %s5 = inlined_call_operand.vmem [shape: f32[1,512], index: 5, kind: input, shape index: {}]
  %s6 = inlined_call_operand.hbm [shape: f32[200,128], index: 6, kind: output, shape index: {0}]
  %s7 = inlined_call_operand.hbm [shape: f32[16,128], index: 7, kind: output, shape index: {1}]
  %8 = xla_tuple %s6, %s7
  %s9 = sld [smem:[#allocation0]]
  $region130: #{tpu_custom_call.1} parent=0
    _
  %s11 = ssub.s32 1, %s9
  %s12 = scalar_select 0, %s11, %s9
  $region1: #{tpu_custom_call.1} parent=0
    #allocation4 [shape = 'u8[32768]{0}', space=vmem, size = 0x8000, scoped, tag = 'input window, operand 4']
    #allocation5 [shape = 'u8[131072]{0}', space=vmem, size = 0x20000, scoped, tag = 'output window, operand 0']
    #allocation6 [shape = 's32[2]{0}', space=sflag, size = 0x8, scoped, tag = 'scoped memory for tpu_custom_call.1']
    #allocation7 [shape = 'u8[8192]{0}', space=vmem, size = 0x2000, scoped, tag = 'output window, operand 1']
    #allocation8 [shape = 's32[2]{0}', space=sflag, size = 0x8, scoped, tag = 'scoped memory for tpu_custom_call.1']
    %13 = vsyncpa [#allocation6], 0
    %s14 = scalar_lea.sflag [#allocation6], 1
    %15 = vsyncpa %s14, 0
    %16 = vsyncpa [#allocation8], 0
    %s17 = scalar_lea.sflag [#allocation8], 1
    %18 = vsyncpa %s17, 0
    loop: start=0, step=1, limit=10
    $region2: #{tpu_custom_call.1} parent=1 // loop_pre_header
      _
    $region3: #{tpu_custom_call.1} parent=1 // loop_header
      %s20 = sphi 0, %s24
      %p21 = scmp.ge.s32.totalorder %s20, 10
      %s27 = sphi 0, %s39
      %s28 = sphi 0, %s35
      %s29 = sphi 0, %s27
      %s30 = sphi 0, %s28
      %s31 = sphi 0, %s29
      %s32 = sphi 0, %s30
      %s42 = sphi 0, %s44
      %s45 = sphi 0, %s42
      %s46 = sphi 0, %s45
      %s62 = sphi 0, %s46
      %s68 = sphi 0, %s70
      %s71 = sphi 0, %s68
      %s72 = sphi 0, %s71
      %s88 = sphi 0, %s72
      %s92 = sphi 0, %s92
      %s94 = sphi 0, %s92
      %s95 = sphi 0, %s94
      %s109 = sphi 0, %s95
      %s113 = sphi 0, %s113
      %s115 = sphi 0, %s113
      %s116 = sphi 0, %s115
      %s130 = sphi 0, %s116
      %s136 = sphi 0, %s138
      %s139 = sphi 0, %s136
      %s140 = sphi 0, %s139
      %s156 = sphi 0, %s140
      %s162 = sphi 0, %s164
      %s165 = sphi 0, %s162
      %s166 = sphi 0, %s165
      %s182 = sphi 0, %s166
      %s188 = sphi 0, %s190
      %s191 = sphi 0, %s188
      %s192 = sphi 0, %s191
      %s208 = sphi 0, %s192
      %s214 = sphi 0, %s216
      %s217 = sphi 0, %s214
      %s218 = sphi 0, %s217
      %s234 = sphi 0, %s218
    $region4: #{tpu_custom_call.1} parent=1 // loop_header_branch
      %23 = sbr.rel (%p21) target = $region8
    $region5: #{tpu_custom_call.1} parent=1 // loop_body
      %s25 = ssub.s32 %s20, 1
      %s26 = ssub.s32 %s20, 2
      %s33 = sadd.s32 1, %s28
      %p34 = scmp.ge.s32.totalorder %s33, 4
      %s35 = scalar_select %p34, 0, %s33
      %s36 = sadd.s32 1, %s27
      %s37 = scalar_select %p34, %s36, %s27
      %p38 = scmp.ge.s32.totalorder %s37, 2
      %s39 = scalar_select %p38, 0, %s37
      %s40 = ssub.s32 %s27, %s39
      %p41 = scmp.eq.s32.totalorder %s40, 0
      %s43 = sadd.s32 %s42, 1
      %s44 = scalar_select %p41, %s42, %s43
      %p47 = pneg %p41
      %p48 = scmp.eq.s32.totalorder %s20, 7
      %p49 = por %p47, %p48
      %p50 = scmp.ne.s32.totalorder %s42, %s45
      %p51 = scmp.eq.s32.totalorder %s20, 0
      %p52 = por %p50, %p51
      %p53 = scmp.ne.s32.totalorder %s42, %s45
      %p54 = scmp.eq.s32.totalorder %s25, 7
      %p55 = por %p53, %p54
      %p56 = scmp.ne.s32.totalorder %s45, %s46
      %p57 = scmp.eq.s32.totalorder %s25, 0
      %p58 = por %p56, %p57
      %p59 = scmp.ne.s32.totalorder %s45, %s46
      %p60 = scmp.eq.s32.totalorder %s26, 7
      %p61 = por %p59, %p60
      %p63 = scmp.ne.s32.totalorder %s46, %s62
      %p64 = scmp.eq.s32.totalorder %s26, 0
      %p65 = por %p63, %p64
      %s66 = ssub.s32 %s27, %s39
      %p67 = scmp.eq.s32.totalorder %s66, 0
      %s69 = sadd.s32 %s68, 1
      %s70 = scalar_select %p67, %s68, %s69
      %p73 = pneg %p67
      %p74 = scmp.eq.s32.totalorder %s20, 7
      %p75 = por %p73, %p74
      %p76 = scmp.ne.s32.totalorder %s68, %s71
      %p77 = scmp.eq.s32.totalorder %s20, 0
      %p78 = por %p76, %p77
      %p79 = scmp.ne.s32.totalorder %s68, %s71
      %p80 = scmp.eq.s32.totalorder %s25, 7
      %p81 = por %p79, %p80
      %p82 = scmp.ne.s32.totalorder %s71, %s72
      %p83 = scmp.eq.s32.totalorder %s25, 0
      %p84 = por %p82, %p83
      %p85 = scmp.ne.s32.totalorder %s71, %s72
      %p86 = scmp.eq.s32.totalorder %s26, 7
      %p87 = por %p85, %p86
      %p89 = scmp.ne.s32.totalorder %s72, %s88
      %p90 = scmp.eq.s32.totalorder %s26, 0
      %p91 = por %p89, %p90
      %s93 = sadd.s32 %s92, 1
      %p96 = scmp.eq.s32.totalorder %s20, 7
      %p97 = scmp.ne.s32.totalorder %s92, %s94
      %p98 = scmp.eq.s32.totalorder %s20, 0
      %p99 = por %p97, %p98
      %p100 = scmp.ne.s32.totalorder %s92, %s94
      %p101 = scmp.eq.s32.totalorder %s25, 7
      %p102 = por %p100, %p101
      %p103 = scmp.ne.s32.totalorder %s94, %s95
      %p104 = scmp.eq.s32.totalorder %s25, 0
      %p105 = por %p103, %p104
      %p106 = scmp.ne.s32.totalorder %s94, %s95
      %p107 = scmp.eq.s32.totalorder %s26, 7
      %p108 = por %p106, %p107
      %p110 = scmp.ne.s32.totalorder %s95, %s109
      %p111 = scmp.eq.s32.totalorder %s26, 0
      %p112 = por %p110, %p111
      %s114 = sadd.s32 %s113, 1
      %p117 = scmp.eq.s32.totalorder %s20, 7
      %p118 = scmp.ne.s32.totalorder %s113, %s115
      %p119 = scmp.eq.s32.totalorder %s20, 0
      %p120 = por %p118, %p119
      %p121 = scmp.ne.s32.totalorder %s113, %s115
      %p122 = scmp.eq.s32.totalorder %s25, 7
      %p123 = por %p121, %p122
      %p124 = scmp.ne.s32.totalorder %s115, %s116
      %p125 = scmp.eq.s32.totalorder %s25, 0
      %p126 = por %p124, %p125
      %p127 = scmp.ne.s32.totalorder %s115, %s116
      %p128 = scmp.eq.s32.totalorder %s26, 7
      %p129 = por %p127, %p128
      %p131 = scmp.ne.s32.totalorder %s116, %s130
      %p132 = scmp.eq.s32.totalorder %s26, 0
      %p133 = por %p131, %p132
      %s134 = ssub.s32 %s28, %s35
      %p135 = scmp.eq.s32.totalorder %s134, 0
      %s137 = sadd.s32 %s136, 1
      %s138 = scalar_select %p135, %s136, %s137
      %p141 = pneg %p135
      %p142 = scmp.eq.s32.totalorder %s20, 7
      %p143 = por %p141, %p142
      %p144 = scmp.ne.s32.totalorder %s136, %s139
      %p145 = scmp.eq.s32.totalorder %s20, 0
      %p146 = por %p144, %p145
      %p147 = scmp.ne.s32.totalorder %s136, %s139
      %p148 = scmp.eq.s32.totalorder %s25, 7
      %p149 = por %p147, %p148
      %p150 = scmp.ne.s32.totalorder %s139, %s140
      %p151 = scmp.eq.s32.totalorder %s25, 0
      %p152 = por %p150, %p151
      %p153 = scmp.ne.s32.totalorder %s139, %s140
      %p154 = scmp.eq.s32.totalorder %s26, 7
      %p155 = por %p153, %p154
      %p157 = scmp.ne.s32.totalorder %s140, %s156
      %p158 = scmp.eq.s32.totalorder %s26, 0
      %p159 = por %p157, %p158
      %s160 = ssub.s32 %s28, %s35
      %p161 = scmp.eq.s32.totalorder %s160, 0
      %s163 = sadd.s32 %s162, 1
      %s164 = scalar_select %p161, %s162, %s163
      %p167 = pneg %p161
      %p168 = scmp.eq.s32.totalorder %s20, 7
      %p169 = por %p167, %p168
      %p170 = scmp.ne.s32.totalorder %s162, %s165
      %p171 = scmp.eq.s32.totalorder %s20, 0
      %p172 = por %p170, %p171
      %p173 = scmp.ne.s32.totalorder %s162, %s165
      %p174 = scmp.eq.s32.totalorder %s25, 7
      %p175 = por %p173, %p174
      %p176 = scmp.ne.s32.totalorder %s165, %s166
      %p177 = scmp.eq.s32.totalorder %s25, 0
      %p178 = por %p176, %p177
      %p179 = scmp.ne.s32.totalorder %s165, %s166
      %p180 = scmp.eq.s32.totalorder %s26, 7
      %p181 = por %p179, %p180
      %p183 = scmp.ne.s32.totalorder %s166, %s182
      %p184 = scmp.eq.s32.totalorder %s26, 0
      %p185 = por %p183, %p184
      %s186 = ssub.s32 %s27, %s39
      %p187 = scmp.eq.s32.totalorder %s186, 0
      %s189 = sadd.s32 %s188, 1
      %s190 = scalar_select %p187, %s188, %s189
      %p193 = pneg %p187
      %p194 = scmp.eq.s32.totalorder %s20, 7
      %p195 = por %p193, %p194
      %p196 = scmp.ne.s32.totalorder %s188, %s191
      %p197 = scmp.eq.s32.totalorder %s20, 0
      %p198 = por %p196, %p197
      %p199 = scmp.ne.s32.totalorder %s188, %s191
      %p200 = scmp.eq.s32.totalorder %s25, 7
      %p201 = por %p199, %p200
      %p202 = scmp.ne.s32.totalorder %s191, %s192
      %p203 = scmp.eq.s32.totalorder %s25, 0
      %p204 = por %p202, %p203
      %p205 = scmp.ne.s32.totalorder %s191, %s192
      %p206 = scmp.eq.s32.totalorder %s26, 7
      %p207 = por %p205, %p206
      %p209 = scmp.ne.s32.totalorder %s192, %s208
      %p210 = scmp.eq.s32.totalorder %s26, 0
      %p211 = por %p209, %p210
      %s212 = ssub.s32 %s27, %s39
      %p213 = scmp.eq.s32.totalorder %s212, 0
      %s215 = sadd.s32 %s214, 1
      %s216 = scalar_select %p213, %s214, %s215
      %p219 = pneg %p213
      %p220 = scmp.eq.s32.totalorder %s20, 7
      %p221 = por %p219, %p220
      %p222 = scmp.ne.s32.totalorder %s214, %s217
      %p223 = scmp.eq.s32.totalorder %s20, 0
      %p224 = por %p222, %p223
      %p225 = scmp.ne.s32.totalorder %s214, %s217
      %p226 = scmp.eq.s32.totalorder %s25, 7
      %p227 = por %p225, %p226
      %p228 = scmp.ne.s32.totalorder %s217, %s218
      %p229 = scmp.eq.s32.totalorder %s25, 0
      %p230 = por %p228, %p229
      %p231 = scmp.ne.s32.totalorder %s217, %s218
      %p232 = scmp.eq.s32.totalorder %s26, 7
      %p233 = por %p231, %p232
      %p235 = scmp.ne.s32.totalorder %s218, %s234
      %p236 = scmp.eq.s32.totalorder %s26, 0
      %p237 = por %p235, %p236
      %p238 = scmp.le.s32.totalorder 1, %s20
      %p239 = scmp.lt.s32.totalorder %s20, 9
      %p240 = pnand %p238, %p239
      %p241 = pneg %p240
      // Predicated region
      $region9: #{tpu_custom_call.1} parent=5 // pred_check
        _
      $region10: #{tpu_custom_call.1} parent=5 // pred_check_branch
        %243 = sbr.rel (%p240) target = $region12
      $region11: #{tpu_custom_call.1} parent=5 // pred_region
        %s244 = ssub.s32 %s20, 1
        // Predicated region
        $region13: #{tpu_custom_call.1} parent=11 // pred_check
          %p245 = pneg %p105
        $region14: #{tpu_custom_call.1} parent=11 // pred_check_branch
          %247 = sbr.rel (%p245) target = $region16
        $region15: #{tpu_custom_call.1} parent=11 // pred_region
          _
        $region16: #{tpu_custom_call.1} parent=11 // pred_fallthru
          _
        // Predicated region
        $region17: #{tpu_custom_call.1} parent=11 // pred_check
          %p248 = pneg %p126
        $region18: #{tpu_custom_call.1} parent=11 // pred_check_branch
          %250 = sbr.rel (%p248) target = $region20
        $region19: #{tpu_custom_call.1} parent=11 // pred_region
          _
        $region20: #{tpu_custom_call.1} parent=11 // pred_fallthru
          _
      $region12: #{tpu_custom_call.1} parent=5 // pred_fallthru
        _
      %p251 = scmp.lt.s32.totalorder %s20, 8
      // Predicated region
      $region21: #{tpu_custom_call.1} parent=5 // pred_check
        %p252 = pneg %p251
      $region22: #{tpu_custom_call.1} parent=5 // pred_check_branch
        %254 = sbr.rel (%p252) target = $region24
      $region23: #{tpu_custom_call.1} parent=5 // pred_region
        // Predicated region
        $region25: #{tpu_custom_call.1} parent=23 // pred_check
          %p255 = pneg %p52
        $region26: #{tpu_custom_call.1} parent=23 // pred_check_branch
          %257 = sbr.rel (%p255) target = $region28
        $region27: #{tpu_custom_call.1} parent=23 // pred_region
          %s258 = smul.u32 16, %s27
          %s259 = ssub.s32 25, %s258
          %p260 = scmp.lt.s32.totalorder %s259, 16
          %s261 = scalar_select %p260, %s259, 16
          %s262 = smul.u32 128, %s261
          %p263 = scmp.lt.s32.totalorder %s258, 24
          %s264 = scalar_select %p263, %s258, 24
          %s265 = smul.addr %s264, 8
          %s266 = scalar_lea.vmem %s0, %s265
          %s267 = smul.u32 16, %s27
          %s268 = ssub.s32 25, %s267
          %p269 = scmp.lt.s32.totalorder %s268, 16
          %s270 = scalar_select %p269, %s268, 16
          %s271 = smul.u32 128, %s270
        $region28: #{tpu_custom_call.1} parent=23 // pred_fallthru
          _
        // Predicated region
        $region29: #{tpu_custom_call.1} parent=23 // pred_check
          %p272 = pneg %p78
        $region30: #{tpu_custom_call.1} parent=23 // pred_check_branch
          %274 = sbr.rel (%p272) target = $region32
        $region31: #{tpu_custom_call.1} parent=23 // pred_region
          %s275 = smul.u32 16, %s27
          %s276 = ssub.s32 25, %s275
          %p277 = scmp.lt.s32.totalorder %s276, 16
          %s278 = scalar_select %p277, %s276, 16
          %s279 = smul.u32 128, %s278
          %p280 = scmp.lt.s32.totalorder %s275, 24
          %s281 = scalar_select %p280, %s275, 24
          %s282 = smul.addr %s281, 8
          %s283 = scalar_lea.vmem %s1, %s282
          %s284 = smul.u32 16, %s27
          %s285 = ssub.s32 25, %s284
          %p286 = scmp.lt.s32.totalorder %s285, 16
          %s287 = scalar_select %p286, %s285, 16
          %s288 = smul.u32 128, %s287
        $region32: #{tpu_custom_call.1} parent=23 // pred_fallthru
          _
        // Predicated region
        $region33: #{tpu_custom_call.1} parent=23 // pred_check
          %p289 = pneg %p146
        $region34: #{tpu_custom_call.1} parent=23 // pred_check_branch
          %291 = sbr.rel (%p289) target = $region36
        $region35: #{tpu_custom_call.1} parent=23 // pred_region
          %s292 = sand.u32 %s136, 1
          %s293 = sand.u32 %s136, 1
          %s294 = smul.addr %s293, 32
          %s295 = scalar_lea.vmem [#allocation4], %s294
          %s296 = smul.addr %s28, 4
          %s297 = scalar_lea.vmem %s4, %s296
          // Predicated region
          $region37: #{tpu_custom_call.1} parent=35 // pred_check
            _
          $region38: #{tpu_custom_call.1} parent=35 // pred_check_branch
            %299 = sbr.rel (0) target = $region40
          $region39: #{tpu_custom_call.1} parent=35 // pred_region
            // Predicated region
            $region41: #{tpu_custom_call.1} parent=39 // pred_check
              _
            $region42: #{tpu_custom_call.1} parent=39 // pred_check_branch
              %301 = sbr.rel target = $region44
            $region43: #{tpu_custom_call.1} parent=39 // pred_region
              // Predicated region
              $region56: #{tpu_custom_call.1} parent=43 // pred_check
                _
              $region57: #{tpu_custom_call.1} parent=43 // pred_check_branch
                %330 = sbr.rel (0) target = $region59
              $region58: #{tpu_custom_call.1} parent=43 // pred_region
                loop: start=0, step=1, limit=1
                $region60: #{tpu_custom_call.1} parent=58 // loop_pre_header
                  _
                $region61: #{tpu_custom_call.1} parent=58 // loop_header
                  %s332 = sphi 0, %s336
                  %p333 = scmp.ge.s32.totalorder %s332, 1
                  %s337 = sphi %s297, %s297
                  %s338 = sphi %s295, %s295
                $region62: #{tpu_custom_call.1} parent=58 // loop_header_branch
                  %335 = sbr.rel (%p333) target = $region66
                $region63: #{tpu_custom_call.1} parent=58 // loop_body
                  _
                $region64: #{tpu_custom_call.1} parent=58 // loop_footer
                  %s336 = sadd.s32 1, %s332
                $region65: #{tpu_custom_call.1} parent=58 // loop_footer_branch
                  %331 = sbr.rel target = $region61
                $region66: #{tpu_custom_call.1} parent=58 // loop_exit
                  _
                loop: start=0, step=1, limit=1
                $region67: #{tpu_custom_call.1} parent=58 // loop_pre_header
                  _
                $region68: #{tpu_custom_call.1} parent=58 // loop_header
                  %s341 = sphi 0, %s345
                  %p342 = scmp.ge.s32.totalorder %s341, 1
                  %s346 = sphi %s297, %s297
                  %s347 = sphi %s295, %s295
                $region69: #{tpu_custom_call.1} parent=58 // loop_header_branch
                  %344 = sbr.rel (%p342) target = $region73
                $region70: #{tpu_custom_call.1} parent=58 // loop_body
                  %v348 = vld [vmem:[%s346] sm:$0xf]
                  %349 = vst [vmem:[%s347] sm:$0xf] %v348
                  %v350 = vld [vmem:[%s346 + $0x10] sm:$0xf]
                  %351 = vst [vmem:[%s347 + $0x4] sm:$0xf] %v350
                  %v352 = vld [vmem:[%s346 + $0x20] sm:$0xf]
                  %353 = vst [vmem:[%s347 + $0x8] sm:$0xf] %v352
                  %v354 = vld [vmem:[%s346 + $0x30] sm:$0xf]
                  %355 = vst [vmem:[%s347 + $0xc] sm:$0xf] %v354
                  %v356 = vld [vmem:[%s346 + $0x40] sm:$0xf]
                  %357 = vst [vmem:[%s347 + $0x10] sm:$0xf] %v356
                  %v358 = vld [vmem:[%s346 + $0x50] sm:$0xf]
                  %359 = vst [vmem:[%s347 + $0x14] sm:$0xf] %v358
                  %v360 = vld [vmem:[%s346 + $0x60] sm:$0xf]
                  %361 = vst [vmem:[%s347 + $0x18] sm:$0xf] %v360
                  %v362 = vld [vmem:[%s346 + $0x70] sm:$0xf]
                  %363 = vst [vmem:[%s347 + $0x1c] sm:$0xf] %v362
                $region71: #{tpu_custom_call.1} parent=58 // loop_footer
                  %s345 = sadd.s32 1, %s341
                $region72: #{tpu_custom_call.1} parent=58 // loop_footer_branch
                  %340 = sbr.rel target = $region68
                $region73: #{tpu_custom_call.1} parent=58 // loop_exit
                  _
              $region59: #{tpu_custom_call.1} parent=43 // pred_fallthru
                _
            $region44: #{tpu_custom_call.1} parent=39 // pred_fallthru
              _
            // Predicated region
            $region45: #{tpu_custom_call.1} parent=39 // pred_check
              _
            $region46: #{tpu_custom_call.1} parent=39 // pred_check_branch
              %303 = sbr.rel (0) target = $region48
            $region47: #{tpu_custom_call.1} parent=39 // pred_region
              loop: start=0, step=1, limit=1
              $region49: #{tpu_custom_call.1} parent=47 // loop_pre_header
                _
              $region50: #{tpu_custom_call.1} parent=47 // loop_header
                %s306 = sphi 0, %s310
                %p307 = scmp.ge.s32.totalorder %s306, 1
                %s311 = sphi %s297, %s297
                %s312 = sphi %s295, %s295
              $region51: #{tpu_custom_call.1} parent=47 // loop_header_branch
                %309 = sbr.rel (%p307) target = $region55
              $region52: #{tpu_custom_call.1} parent=47 // loop_body
                %v313 = vld [vmem:[%s311] sm:$0xf]
                %314 = vst [vmem:[%s312] sm:$0xf] %v313
                %v315 = vld [vmem:[%s311 + $0x10] sm:$0xf]
                %316 = vst [vmem:[%s312 + $0x4] sm:$0xf] %v315
                %v317 = vld [vmem:[%s311 + $0x20] sm:$0xf]
                %318 = vst [vmem:[%s312 + $0x8] sm:$0xf] %v317
                %v319 = vld [vmem:[%s311 + $0x30] sm:$0xf]
                %320 = vst [vmem:[%s312 + $0xc] sm:$0xf] %v319
                %v321 = vld [vmem:[%s311 + $0x40] sm:$0xf]
                %322 = vst [vmem:[%s312 + $0x10] sm:$0xf] %v321
                %v323 = vld [vmem:[%s311 + $0x50] sm:$0xf]
                %324 = vst [vmem:[%s312 + $0x14] sm:$0xf] %v323
                %v325 = vld [vmem:[%s311 + $0x60] sm:$0xf]
                %326 = vst [vmem:[%s312 + $0x18] sm:$0xf] %v325
                %v327 = vld [vmem:[%s311 + $0x70] sm:$0xf]
                %328 = vst [vmem:[%s312 + $0x1c] sm:$0xf] %v327
              $region53: #{tpu_custom_call.1} parent=47 // loop_footer
                %s310 = sadd.s32 1, %s306
              $region54: #{tpu_custom_call.1} parent=47 // loop_footer_branch
                %305 = sbr.rel target = $region50
              $region55: #{tpu_custom_call.1} parent=47 // loop_exit
                _
            $region48: #{tpu_custom_call.1} parent=39 // pred_fallthru
              _
          $region40: #{tpu_custom_call.1} parent=35 // pred_fallthru
            _
          %364 = vnop
        $region36: #{tpu_custom_call.1} parent=23 // pred_fallthru
          _
        // Predicated region
        $region74: #{tpu_custom_call.1} parent=23 // pred_check
          %p365 = pneg %p172
        $region75: #{tpu_custom_call.1} parent=23 // pred_check_branch
          %367 = sbr.rel (%p365) target = $region77
        $region76: #{tpu_custom_call.1} parent=23 // pred_region
          %p368 = scmp.lt.s32.totalorder %s28, 3
          %s369 = scalar_select %p368, %s28, 3
          %s370 = scalar_lea.vmem %s5, %s369
        $region77: #{tpu_custom_call.1} parent=23 // pred_fallthru
          _
      $region24: #{tpu_custom_call.1} parent=5 // pred_fallthru
        _
      %p371 = scmp.le.s32.totalorder 1, %s20
      %p372 = scmp.lt.s32.totalorder %s20, 9
      %p373 = pnand %p371, %p372
      %p374 = pneg %p373
      // Predicated region
      $region78: #{tpu_custom_call.1} parent=5 // pred_check
        _
      $region79: #{tpu_custom_call.1} parent=5 // pred_check_branch
        %376 = sbr.rel (%p373) target = $region81
      $region80: #{tpu_custom_call.1} parent=5 // pred_region
        %s377 = ssub.s32 %s20, 1
        %s378 = sand.u32 %s139, 1
        %s379 = sand.u32 %s139, 1
        %s380 = smul.addr %s379, 32
        %s381 = scalar_lea.vmem [#allocation4], %s380
        // Predicated region
        $region82: #{tpu_custom_call.1} parent=80 // pred_check
          %p382 = pneg %p152
        $region83: #{tpu_custom_call.1} parent=80 // pred_check_branch
          %384 = sbr.rel (%p382) target = $region85
        $region84: #{tpu_custom_call.1} parent=80 // pred_region
          _
        $region85: #{tpu_custom_call.1} parent=80 // pred_fallthru
          _
        %s385 = smul.u32 16, %s29
        %s386 = ssub.s32 25, %s385
        %p387 = scmp.lt.s32.totalorder %s386, 16
        %s388 = scalar_select %p387, %s386, 16
        %s389 = smul.u32 128, %s388
        %p390 = scmp.lt.s32.totalorder %s385, 24
        %s391 = scalar_select %p390, %s385, 24
        %s392 = smul.addr %s391, 8
        %s393 = scalar_lea.vmem %s0, %s392
        %p394 = pneg %p58
        %p395 = pneg %p55
        %s396 = smul.u32 16, %s29
        %s397 = ssub.s32 25, %s396
        %p398 = scmp.lt.s32.totalorder %s397, 16
        %s399 = scalar_select %p398, %s397, 16
        %s400 = smul.u32 128, %s399
        %p401 = scmp.lt.s32.totalorder %s396, 24
        %s402 = scalar_select %p401, %s396, 24
        %s403 = smul.addr %s402, 8
        %s404 = scalar_lea.vmem %s1, %s403
        %p405 = pneg %p84
        %p406 = pneg %p81
        %p407 = pneg %p105
        %p408 = pneg %p102
        %p409 = pneg %p126
        %p410 = pneg %p123
        %s411 = sand.u32 %s139, 1
        %s412 = sand.u32 %s139, 1
        %s413 = smul.addr %s412, 32
        %s414 = scalar_lea.vmem [#allocation4], %s413
        %p415 = pneg %p152
        %p416 = pneg %p149
        %p417 = scmp.lt.s32.totalorder %s30, 3
        %s418 = scalar_select %p417, %s30, 3
        %s419 = scalar_lea.vmem %s5, %s418
        %p420 = pneg %p178
        %p421 = pneg %p175
        %p422 = pneg %p204
        %p423 = pneg %p201
        %s424 = sand.u32 %s191, 1
        %s425 = scalar_lea.sflag [#allocation6], %s424
        %s426 = sand.u32 %s191, 1
        %s427 = smul.addr %s426, 128
        %s428 = scalar_lea.vmem [#allocation5], %s427
        %p429 = pneg %p230
        %p430 = pneg %p227
        %s431 = sand.u32 %s217, 1
        %s432 = scalar_lea.sflag [#allocation8], %s431
        %s433 = sand.u32 %s217, 1
        %s434 = smul.addr %s433, 8
        %s435 = scalar_lea.vmem [#allocation7], %s434
        %s436 = smul.u32 16, %s29
        %s437 = ssub.s32 25, %s436
        %p438 = scmp.lt.s32.totalorder %s437, 16
        %s439 = scalar_select %p438, %s437, 16
        %s440 = smul.u32 128, %s439
        %p441 = scmp.lt.s32.totalorder %s436, 24
        %s442 = scalar_select %p441, %s436, 24
        %s443 = smul.addr %s442, 8
        %s444 = scalar_lea.vmem %s0, %s443
        %s445 = smul.u32 16, %s29
        %s446 = ssub.s32 25, %s445
        %p447 = scmp.lt.s32.totalorder %s446, 16
        %s448 = scalar_select %p447, %s446, 16
        %s449 = smul.u32 128, %s448
        %s450 = smul.u32 16, %s29
        %s451 = ssub.s32 25, %s450
        %p452 = scmp.lt.s32.totalorder %s451, 16
        %s453 = scalar_select %p452, %s451, 16
        %s454 = smul.u32 128, %s453
        %p455 = scmp.lt.s32.totalorder %s450, 24
        %s456 = scalar_select %p455, %s450, 24
        %s457 = smul.addr %s456, 8
        %s458 = scalar_lea.vmem %s1, %s457
        %s459 = smul.u32 16, %s29
        %s460 = ssub.s32 25, %s459
        %p461 = scmp.lt.s32.totalorder %s460, 16
        %s462 = scalar_select %p461, %s460, 16
        %s463 = smul.u32 128, %s462
        %p464 = scmp.lt.s32.totalorder %s30, 3
        %s465 = scalar_select %p464, %s30, 3
        %s466 = scalar_lea.vmem %s5, %s465
        %s467 = smul.u32 16, %s29
        %s468 = ssub.s32 25, %s467
        %p469 = scmp.lt.s32.totalorder %s468, 16
        %s470 = scalar_select %p469, %s468, 16
        %s471 = smul.u32 128, %s470
        %p473 = scmp.eq.s32.totalorder %s30, 0
        // Predicated region
        $region86: #{tpu_custom_call.1} parent=80 // pred_check
          %p474 = pneg %p473
        $region87: #{tpu_custom_call.1} parent=80 // pred_check_branch
          %476 = sbr.rel (%p474) target = $region89
        $region88: #{tpu_custom_call.1} parent=80 // pred_region
          %v477 = vld [vmem:[%s444] sm:$0xff]
          %v478 = vld [vmem:[%s444 + $0x8] sm:$0xff]
          %v479 = vld [vmem:[%s444 + $0x10] sm:$0xff]
          %v480 = vld [vmem:[%s444 + $0x18] sm:$0xff]
          %v481 = vld [vmem:[%s444 + $0x20] sm:$0xff]
          %v482 = vld [vmem:[%s444 + $0x28] sm:$0xff]
          %v483 = vld [vmem:[%s444 + $0x30] sm:$0xff]
          %v484 = vld [vmem:[%s444 + $0x38] sm:$0xff]
          %v485 = vld [vmem:[%s444 + $0x40] sm:$0xff]
          %v486 = vld [vmem:[%s444 + $0x48] sm:$0xff]
          %v487 = vld [vmem:[%s444 + $0x50] sm:$0xff]
          %v488 = vld [vmem:[%s444 + $0x58] sm:$0xff]
          %v489 = vld [vmem:[%s444 + $0x60] sm:$0xff]
          %v490 = vld [vmem:[%s444 + $0x68] sm:$0xff]
          %v491 = vld [vmem:[%s444 + $0x70] sm:$0xff]
          %v492 = vld [vmem:[%s444 + $0x78] sm:$0xff]
          %v493 = vpack.c.bf16 %v478, %v477
          %v494 = vpack.c.bf16 %v480, %v479
          %v495 = vpack.c.bf16 %v482, %v481
          %v496 = vpack.c.bf16 %v484, %v483
          %v497 = vpack.c.bf16 %v486, %v485
          %v498 = vpack.c.bf16 %v488, %v487
          %v499 = vpack.c.bf16 %v490, %v489
          %v500 = vpack.c.bf16 %v492, %v491
          %v501 = vld [vmem:[%s2] sm:$0xf]
          %v502 = vld [vmem:[%s2 + $0x4] sm:$0xf]
          %v503 = vld [vmem:[%s2 + $0x8] sm:$0xf]
          %v504 = vld [vmem:[%s2 + $0xc] sm:$0xf]
          %v505 = vld [vmem:[%s2 + $0x10] sm:$0xf]
          %v506 = vld [vmem:[%s2 + $0x14] sm:$0xf]
          %v507 = vld [vmem:[%s2 + $0x18] sm:$0xf]
          %v508 = vld [vmem:[%s2 + $0x1c] sm:$0xf]
          %v509 = vld [vmem:[%s3] sm:$0x1]
          %v511 = vlaneseq
          %v512 = vshrl.u32 %v511, 7
          %v513 = vsub.s32 0, %v512
          %v514 = vrot.slane %v509, %v513
          %v524 = vunpack.c.l.b16 %v501
          %v525 = vunpack.c.l.b16 %v502
          %v526 = vunpack.c.l.b16 %v503
          %v527 = vunpack.c.l.b16 %v504
          %v528 = vunpack.c.l.b16 %v505
          %v529 = vunpack.c.l.b16 %v506
          %v530 = vunpack.c.l.b16 %v507
          %v531 = vunpack.c.l.b16 %v508
          %v532 = vpack.c.b16 %v525, %v524
          %v533 = vpack.c.b16 %v527, %v526
          %v534 = vpack.c.b16 %v529, %v528
          %v535 = vpack.c.b16 %v531, %v530
          %vm540 = vcmask 523264
          %v542 = vsel %vm540, %v493, 0
          %v545 = vsel %vm540, %v494, 0
          %v548 = vsel %vm540, %v495, 0
          %v551 = vsel %vm540, %v496, 0
          %v554 = vsel %vm540, %v497, 0
          %v557 = vsel %vm540, %v498, 0
          %v560 = vsel %vm540, %v499, 0
          %v563 = vsel %vm540, %v500, 0
          %565 = vmatprep.subr.bf16.mxu0 0
          %566 = vmatpush1.bf16.msra.mxu0 %v532
          %567 = vmatprep.subr.bf16.mxu0 0
          %568 = vmatpush1.bf16.msra.mxu0 %v533
          %569 = vmatprep.subr.bf16.mxu0 0
          %570 = vmatpush1.bf16.msra.mxu0 %v534
          %571 = vmatprep.subr.bf16.mxu0 0
          %572 = vmatpush1.bf16.msra.mxu0 %v535
          %573 = vmatprep.subr.bf16.mxu0 0
          %574 = vmatpush1.bf16.msra.mxu0 0
          %575 = vmatprep.subr.bf16.mxu0 0
          %576 = vmatpush1.bf16.msra.mxu0 0
          %577 = vmatprep.subr.bf16.mxu0 0
          %578 = vmatpush1.bf16.msra.mxu0 0
          %579 = vmatprep.subr.bf16.mxu0 0
          %580 = vmatpush1.bf16.msra.mxu0 0
          %581 = vmatprep.subr.bf16.mxu0 0
          %582 = vmatpush1.bf16.msra.mxu0 0
          %583 = vmatprep.subr.bf16.mxu0 0
          %584 = vmatpush1.bf16.msra.mxu0 0
          %585 = vmatprep.subr.bf16.mxu0 0
          %586 = vmatpush1.bf16.msra.mxu0 0
          %587 = vmatprep.subr.bf16.mxu0 0
          %588 = vmatpush1.bf16.msra.mxu0 0
          %589 = vmatprep.subr.bf16.mxu0 0
          %590 = vmatpush1.bf16.msra.mxu0 0
          %591 = vmatprep.subr.bf16.mxu0 0
          %592 = vmatpush1.bf16.msra.mxu0 0
          %593 = vmatprep.subr.bf16.mxu0 0
          %594 = vmatpush1.bf16.msra.mxu0 0
          %595 = vmatprep.subr.bf16.mxu0 0
          %596 = vmatpush1.bf16.msra.mxu0 0
          %597 = vmatprep.mubr.bf16.mxu0 0
          %598 = vmatmul.mubr.bf16.gmra.mrb[0].mxu0 %v542
          %v599 = vpop.f32.mrb[0].mxu0
          %v600 = vadd.f32 %v514, %v599
          %v601 = vpop.f32.mrb[0].mxu0
          %v602 = vpop.f32.mrb[0].mxu0
          %v603 = vadd.f32 %v514, %v602
          %v604 = vpop.f32.mrb[0].mxu0
          %605 = vmatprep.mubr.bf16.mxu0 0
          %606 = vmatmul.mubr.bf16.gmra.mrb[0].mxu0 %v545
          %v607 = vpop.f32.mrb[0].mxu0
          %v608 = vadd.f32 %v514, %v607
          %v609 = vpop.f32.mrb[0].mxu0
          %v610 = vpop.f32.mrb[0].mxu0
          %v611 = vadd.f32 %v514, %v610
          %v612 = vpop.f32.mrb[0].mxu0
          %613 = vmatprep.mubr.bf16.mxu0 0
          %614 = vmatmul.mubr.bf16.gmra.mrb[0].mxu0 %v548
          %v615 = vpop.f32.mrb[0].mxu0
          %v616 = vadd.f32 %v514, %v615
          %v617 = vpop.f32.mrb[0].mxu0
          %v618 = vpop.f32.mrb[0].mxu0
          %v619 = vadd.f32 %v514, %v618
          %v620 = vpop.f32.mrb[0].mxu0
          %621 = vmatprep.mubr.bf16.mxu0 0
          %622 = vmatmul.mubr.bf16.gmra.mrb[0].mxu0 %v551
          %v623 = vpop.f32.mrb[0].mxu0
          %v624 = vadd.f32 %v514, %v623
          %v625 = vpop.f32.mrb[0].mxu0
          %v626 = vpop.f32.mrb[0].mxu0
          %v627 = vadd.f32 %v514, %v626
          %v628 = vpop.f32.mrb[0].mxu0
          %629 = vmatprep.mubr.bf16.mxu0 0
          %630 = vmatmul.mubr.bf16.gmra.mrb[0].mxu0 %v554
          %v631 = vpop.f32.mrb[0].mxu0
          %v632 = vadd.f32 %v514, %v631
          %v633 = vpop.f32.mrb[0].mxu0
          %v634 = vpop.f32.mrb[0].mxu0
          %v635 = vadd.f32 %v514, %v634
          %v636 = vpop.f32.mrb[0].mxu0
          %637 = vmatprep.mubr.bf16.mxu0 0
          %638 = vmatmul.mubr.bf16.gmra.mrb[0].mxu0 %v557
          %v639 = vpop.f32.mrb[0].mxu0
          %v640 = vadd.f32 %v514, %v639
          %v641 = vpop.f32.mrb[0].mxu0
          %v642 = vpop.f32.mrb[0].mxu0
          %v643 = vadd.f32 %v514, %v642
          %v644 = vpop.f32.mrb[0].mxu0
          %645 = vmatprep.mubr.bf16.mxu0 0
          %646 = vmatmul.mubr.bf16.gmra.mrb[0].mxu0 %v560
          %v647 = vpop.f32.mrb[0].mxu0
          %v648 = vadd.f32 %v514, %v647
          %v649 = vpop.f32.mrb[0].mxu0
          %v650 = vpop.f32.mrb[0].mxu0
          %v651 = vadd.f32 %v514, %v650
          %v652 = vpop.f32.mrb[0].mxu0
          %653 = vmatprep.mubr.bf16.mxu0 0
          %654 = vmatmul.mubr.bf16.gmra.mrb[0].mxu0 %v563
          %v655 = vpop.f32.mrb[0].mxu0
          %v656 = vadd.f32 %v514, %v655
          %v657 = vpop.f32.mrb[0].mxu0
          %v658 = vpop.f32.mrb[0].mxu0
          %v659 = vadd.f32 %v514, %v658
          %v660 = vpop.f32.mrb[0].mxu0
          %661 = vdwg.mxu0
          %662 = vmax.xlane.f32.xlu0 %v600
          %v663 = vpop.xlane.xlu0 %662
          %664 = vmax.xlane.f32.xlu0 %v603
          %v665 = vpop.xlane.xlu0 %664
          %666 = vmax.xlane.f32.xlu0 %v608
          %v667 = vpop.xlane.xlu0 %666
          %668 = vmax.xlane.f32.xlu0 %v611
          %v669 = vpop.xlane.xlu0 %668
          %670 = vmax.xlane.f32.xlu0 %v616
          %v671 = vpop.xlane.xlu0 %670
          %672 = vmax.xlane.f32.xlu0 %v619
          %v673 = vpop.xlane.xlu0 %672
          %674 = vmax.xlane.f32.xlu0 %v624
          %v675 = vpop.xlane.xlu0 %674
          %676 = vmax.xlane.f32.xlu0 %v627
          %v677 = vpop.xlane.xlu0 %676
          %678 = vmax.xlane.f32.xlu0 %v632
          %v679 = vpop.xlane.xlu0 %678
          %680 = vmax.xlane.f32.xlu0 %v635
          %v681 = vpop.xlane.xlu0 %680
          %682 = vmax.xlane.f32.xlu0 %v640
          %v683 = vpop.xlane.xlu0 %682
          %684 = vmax.xlane.f32.xlu0 %v643
          %v685 = vpop.xlane.xlu0 %684
          %686 = vmax.xlane.f32.xlu0 %v648
          %v687 = vpop.xlane.xlu0 %686
          %688 = vmax.xlane.f32.xlu0 %v651
          %v689 = vpop.xlane.xlu0 %688
          %690 = vmax.xlane.f32.xlu0 %v656
          %v691 = vpop.xlane.xlu0 %690
          %692 = vmax.xlane.f32.xlu0 %v659
          %v693 = vpop.xlane.xlu0 %692
          %v694 = vsub.f32 %v600, %v663
          %v695 = vsub.f32 %v603, %v665
          %v696 = vsub.f32 %v608, %v667
          %v697 = vsub.f32 %v611, %v669
          %v698 = vsub.f32 %v616, %v671
          %v699 = vsub.f32 %v619, %v673
          %v700 = vsub.f32 %v624, %v675
          %v701 = vsub.f32 %v627, %v677
          %v702 = vsub.f32 %v632, %v679
          %v703 = vsub.f32 %v635, %v681
          %v704 = vsub.f32 %v640, %v683
          %v705 = vsub.f32 %v643, %v685
          %v706 = vsub.f32 %v648, %v687
          %v707 = vsub.f32 %v651, %v689
          %v708 = vsub.f32 %v656, %v691
          %v709 = vsub.f32 %v659, %v693
          %v710 = vmul.f32 %v694, 1.442695
          %v711 = vpow.pop %v710
          %v712 = vmul.f32 %v695, 1.442695
          %v713 = vpow.pop %v712
          %v714 = vmul.f32 %v696, 1.442695
          %v715 = vpow.pop %v714
          %v716 = vmul.f32 %v697, 1.442695
          %v717 = vpow.pop %v716
          %v718 = vmul.f32 %v698, 1.442695
          %v719 = vpow.pop %v718
          %v720 = vmul.f32 %v699, 1.442695
          %v721 = vpow.pop %v720
          %v722 = vmul.f32 %v700, 1.442695
          %v723 = vpow.pop %v722
          %v724 = vmul.f32 %v701, 1.442695
          %v725 = vpow.pop %v724
          %v726 = vmul.f32 %v702, 1.442695
          %v727 = vpow.pop %v726
          %v728 = vmul.f32 %v703, 1.442695
          %v729 = vpow.pop %v728
          %v730 = vmul.f32 %v704, 1.442695
          %v731 = vpow.pop %v730
          %v732 = vmul.f32 %v705, 1.442695
          %v733 = vpow.pop %v732
          %v734 = vmul.f32 %v706, 1.442695
          %v735 = vpow.pop %v734
          %v736 = vmul.f32 %v707, 1.442695
          %v737 = vpow.pop %v736
          %v738 = vmul.f32 %v708, 1.442695
          %v739 = vpow.pop %v738
          %v740 = vmul.f32 %v709, 1.442695
          %v741 = vpow.pop %v740
          %742 = vadd.xlane.f32.xlu0 %v711
          %v743 = vpop.xlane.xlu0 %742
          %744 = vadd.xlane.f32.xlu0 %v713
          %v745 = vpop.xlane.xlu0 %744
          %746 = vadd.xlane.f32.xlu0 %v715
          %v747 = vpop.xlane.xlu0 %746
          %748 = vadd.xlane.f32.xlu0 %v717
          %v749 = vpop.xlane.xlu0 %748
          %750 = vadd.xlane.f32.xlu0 %v719
          %v751 = vpop.xlane.xlu0 %750
          %752 = vadd.xlane.f32.xlu0 %v721
          %v753 = vpop.xlane.xlu0 %752
          %754 = vadd.xlane.f32.xlu0 %v723
          %v755 = vpop.xlane.xlu0 %754
          %756 = vadd.xlane.f32.xlu0 %v725
          %v757 = vpop.xlane.xlu0 %756
          %758 = vadd.xlane.f32.xlu0 %v727
          %v759 = vpop.xlane.xlu0 %758
          %760 = vadd.xlane.f32.xlu0 %v729
          %v761 = vpop.xlane.xlu0 %760
          %762 = vadd.xlane.f32.xlu0 %v731
          %v763 = vpop.xlane.xlu0 %762
          %764 = vadd.xlane.f32.xlu0 %v733
          %v765 = vpop.xlane.xlu0 %764
          %766 = vadd.xlane.f32.xlu0 %v735
          %v767 = vpop.xlane.xlu0 %766
          %768 = vadd.xlane.f32.xlu0 %v737
          %v769 = vpop.xlane.xlu0 %768
          %770 = vadd.xlane.f32.xlu0 %v739
          %v771 = vpop.xlane.xlu0 %770
          %772 = vadd.xlane.f32.xlu0 %v741
          %v773 = vpop.xlane.xlu0 %772
          %v774 = vrcp.pop %v743
          %v775 = vmul.f32 %v711, %v774
          %v776 = vrcp.pop %v745
          %v777 = vmul.f32 %v713, %v776
          %v778 = vrcp.pop %v747
          %v779 = vmul.f32 %v715, %v778
          %v780 = vrcp.pop %v749
          %v781 = vmul.f32 %v717, %v780
          %v782 = vrcp.pop %v751
          %v783 = vmul.f32 %v719, %v782
          %v784 = vrcp.pop %v753
          %v785 = vmul.f32 %v721, %v784
          %v786 = vrcp.pop %v755
          %v787 = vmul.f32 %v723, %v786
          %v788 = vrcp.pop %v757
          %v789 = vmul.f32 %v725, %v788
          %v790 = vrcp.pop %v759
          %v791 = vmul.f32 %v727, %v790
          %v792 = vrcp.pop %v761
          %v793 = vmul.f32 %v729, %v792
          %v794 = vrcp.pop %v763
          %v795 = vmul.f32 %v731, %v794
          %v796 = vrcp.pop %v765
          %v797 = vmul.f32 %v733, %v796
          %v798 = vrcp.pop %v767
          %v799 = vmul.f32 %v735, %v798
          %v800 = vrcp.pop %v769
          %v801 = vmul.f32 %v737, %v800
          %v802 = vrcp.pop %v771
          %v803 = vmul.f32 %v739, %v802
          %v804 = vrcp.pop %v773
          %v805 = vmul.f32 %v741, %v804
          %806 = vst [vmem:[#allocation2] sm:$0xff] %v775
          %807 = vst [vmem:[#allocation2 + $0x8] sm:$0xff] %v777
          %808 = vst [vmem:[#allocation2 + $0x10] sm:$0xff] %v779
          %809 = vst [vmem:[#allocation2 + $0x18] sm:$0xff] %v781
          %810 = vst [vmem:[#allocation2 + $0x20] sm:$0xff] %v783
          %811 = vst [vmem:[#allocation2 + $0x28] sm:$0xff] %v785
          %812 = vst [vmem:[#allocation2 + $0x30] sm:$0xff] %v787
          %813 = vst [vmem:[#allocation2 + $0x38] sm:$0xff] %v789
          %814 = vst [vmem:[#allocation2 + $0x40] sm:$0xff] %v791
          %815 = vst [vmem:[#allocation2 + $0x48] sm:$0xff] %v793
          %816 = vst [vmem:[#allocation2 + $0x50] sm:$0xff] %v795
          %817 = vst [vmem:[#allocation2 + $0x58] sm:$0xff] %v797
          %818 = vst [vmem:[#allocation2 + $0x60] sm:$0xff] %v799
          %819 = vst [vmem:[#allocation2 + $0x68] sm:$0xff] %v801
          %820 = vst [vmem:[#allocation2 + $0x70] sm:$0xff] %v803
          %821 = vst [vmem:[#allocation2 + $0x78] sm:$0xff] %v805
          %p822 = scmp.ne.s32.totalorder %s29, 1
          // Predicated region
          $region90: #{tpu_custom_call.1} parent=88 // pred_check
            %p823 = pneg %p822
          $region91: #{tpu_custom_call.1} parent=88 // pred_check_branch
            %825 = sbr.rel (%p823) target = $region93
          $region92: #{tpu_custom_call.1} parent=88 // pred_region
            %v826 = vadd.f32 %v775, %v777
            %v827 = vadd.f32 %v826, %v779
            %v828 = vadd.f32 %v827, %v781
            %v829 = vadd.f32 %v828, %v783
            %v830 = vadd.f32 %v829, %v785
            %v831 = vadd.f32 %v830, %v787
            %v832 = vadd.f32 %v831, %v789
            %v833 = vadd.f32 %v832, %v791
            %v834 = vadd.f32 %v833, %v793
            %v835 = vadd.f32 %v834, %v795
            %v836 = vadd.f32 %v835, %v797
            %v837 = vadd.f32 %v836, %v799
            %v838 = vadd.f32 %v837, %v801
            %v839 = vadd.f32 %v838, %v803
            %v840 = vadd.f32 %v839, %v805
            %v841 = vrot.slane %v840, 4
            %v842 = vadd.f32 %v840, %v841
            %v843 = vrot.slane %v842, 2
            %v844 = vadd.f32 %v842, %v843
            %v845 = vrot.slane %v844, 1
            %v846 = vadd.f32 %v844, %v845
            %847 = vst [vmem:[%s435] sm:$0xff] %v846
          $region93: #{tpu_custom_call.1} parent=88 // pred_fallthru
            _
          %p848 = scmp.eq.s32.totalorder %s29, 1
          // Predicated region
          $region94: #{tpu_custom_call.1} parent=88 // pred_check
            %p849 = pneg %p848
          $region95: #{tpu_custom_call.1} parent=88 // pred_check_branch
            %851 = sbr.rel (%p849) target = $region97
          $region96: #{tpu_custom_call.1} parent=88 // pred_region
            %v852 = vlaneseq
            %v853 = vshrl.u32 %v852, 7
            %v854 = vadd.s32 %v853, 8
            %v855 = vadd.s32 %v853, 16
            %v856 = vadd.s32 %v853, 24
            %v857 = vadd.s32 %v853, 32
            %v858 = vadd.s32 %v853, 40
            %v859 = vadd.s32 %v853, 48
            %v860 = vadd.s32 %v853, 56
            %v861 = vadd.s32 %v853, 64
            %v862 = vadd.s32 %v853, 72
            %v863 = vadd.s32 %v853, 80
            %v864 = vadd.s32 %v853, 88
            %v865 = vadd.s32 %v853, 96
            %v866 = vadd.s32 %v853, 104
            %v867 = vadd.s32 %v853, 112
            %v868 = vadd.s32 %v853, 120
            %s869 = smul.u32 %s29, 128
            %v870 = vstv %s869
            %v871 = vadd.s32 %v853, %v870
            %v872 = vadd.s32 %v854, %v870
            %v873 = vadd.s32 %v855, %v870
            %v874 = vadd.s32 %v856, %v870
            %v875 = vadd.s32 %v857, %v870
            %v876 = vadd.s32 %v858, %v870
            %v877 = vadd.s32 %v859, %v870
            %v878 = vadd.s32 %v860, %v870
            %v879 = vadd.s32 %v861, %v870
            %v880 = vadd.s32 %v862, %v870
            %v881 = vadd.s32 %v863, %v870
            %v882 = vadd.s32 %v864, %v870
            %v883 = vadd.s32 %v865, %v870
            %v884 = vadd.s32 %v866, %v870
            %v885 = vadd.s32 %v867, %v870
            %v886 = vadd.s32 %v868, %v870
            %vm887 = vcmp.lt.s32.totalorder %v871, 200
            %vm888 = vcmp.lt.s32.totalorder %v872, 200
            %vm889 = vcmp.lt.s32.totalorder %v873, 200
            %vm890 = vcmp.lt.s32.totalorder %v874, 200
            %vm891 = vcmp.lt.s32.totalorder %v875, 200
            %vm892 = vcmp.lt.s32.totalorder %v876, 200
            %vm893 = vcmp.lt.s32.totalorder %v877, 200
            %vm894 = vcmp.lt.s32.totalorder %v878, 200
            %vm895 = vcmp.lt.s32.totalorder %v879, 200
            %vm896 = vcmp.lt.s32.totalorder %v880, 200
            %vm897 = vcmp.lt.s32.totalorder %v881, 200
            %vm898 = vcmp.lt.s32.totalorder %v882, 200
            %vm899 = vcmp.lt.s32.totalorder %v883, 200
            %vm900 = vcmp.lt.s32.totalorder %v884, 200
            %vm901 = vcmp.lt.s32.totalorder %v885, 200
            %vm902 = vcmp.lt.s32.totalorder %v886, 200
            %v903 = vsel %vm887, %v775, 0.0
            %v904 = vsel %vm888, %v777, 0.0
            %v905 = vsel %vm889, %v779, 0.0
            %v906 = vsel %vm890, %v781, 0.0
            %v907 = vsel %vm891, %v783, 0.0
            %v908 = vsel %vm892, %v785, 0.0
            %v909 = vsel %vm893, %v787, 0.0
            %v910 = vsel %vm894, %v789, 0.0
            %v911 = vsel %vm895, %v791, 0.0
            %v912 = vsel %vm896, %v793, 0.0
            %v913 = vsel %vm897, %v795, 0.0
            %v914 = vsel %vm898, %v797, 0.0
            %v915 = vsel %vm899, %v799, 0.0
            %v916 = vsel %vm900, %v801, 0.0
            %v917 = vsel %vm901, %v803, 0.0
            %v918 = vsel %vm902, %v805, 0.0
            %v919 = vadd.f32 %v903, %v904
            %v920 = vadd.f32 %v919, %v905
            %v921 = vadd.f32 %v920, %v906
            %v922 = vadd.f32 %v921, %v907
            %v923 = vadd.f32 %v922, %v908
            %v924 = vadd.f32 %v923, %v909
            %v925 = vadd.f32 %v924, %v910
            %v926 = vadd.f32 %v925, %v911
            %v927 = vadd.f32 %v926, %v912
            %v928 = vadd.f32 %v927, %v913
            %v929 = vadd.f32 %v928, %v914
            %v930 = vadd.f32 %v929, %v915
            %v931 = vadd.f32 %v930, %v916
            %v932 = vadd.f32 %v931, %v917
            %v933 = vadd.f32 %v932, %v918
            %v934 = vrot.slane %v933, 4
            %v935 = vadd.f32 %v933, %v934
            %v936 = vrot.slane %v935, 2
            %v937 = vadd.f32 %v935, %v936
            %v938 = vrot.slane %v937, 1
            %v939 = vadd.f32 %v937, %v938
            %940 = vst [vmem:[%s435] sm:$0xff] %v939
          $region97: #{tpu_custom_call.1} parent=88 // pred_fallthru
            _
        $region89: #{tpu_custom_call.1} parent=80 // pred_fallthru
          _
        %v941 = vld [vmem:[%s458] sm:$0xff]
        %v942 = vld [vmem:[%s458 + $0x8] sm:$0xff]
        %v943 = vld [vmem:[%s458 + $0x10] sm:$0xff]
        %v944 = vld [vmem:[%s458 + $0x18] sm:$0xff]
        %v945 = vld [vmem:[%s458 + $0x20] sm:$0xff]
        %v946 = vld [vmem:[%s458 + $0x28] sm:$0xff]
        %v947 = vld [vmem:[%s458 + $0x30] sm:$0xff]
        %v948 = vld [vmem:[%s458 + $0x38] sm:$0xff]
        %v949 = vld [vmem:[%s458 + $0x40] sm:$0xff]
        %v950 = vld [vmem:[%s458 + $0x48] sm:$0xff]
        %v951 = vld [vmem:[%s458 + $0x50] sm:$0xff]
        %v952 = vld [vmem:[%s458 + $0x58] sm:$0xff]
        %v953 = vld [vmem:[%s458 + $0x60] sm:$0xff]
        %v954 = vld [vmem:[%s458 + $0x68] sm:$0xff]
        %v955 = vld [vmem:[%s458 + $0x70] sm:$0xff]
        %v956 = vld [vmem:[%s458 + $0x78] sm:$0xff]
        %v957 = vpack.c.bf16 %v942, %v941
        %v958 = vpack.c.bf16 %v944, %v943
        %v959 = vpack.c.bf16 %v946, %v945
        %v960 = vpack.c.bf16 %v948, %v947
        %v961 = vpack.c.bf16 %v950, %v949
        %v962 = vpack.c.bf16 %v952, %v951
        %v963 = vpack.c.bf16 %v954, %v953
        %v964 = vpack.c.bf16 %v956, %v955
        %v965 = vld [vmem:[%s381] sm:$0xf]
        %v966 = vld [vmem:[%s381 + $0x4] sm:$0xf]
        %v967 = vld [vmem:[%s381 + $0x8] sm:$0xf]
        %v968 = vld [vmem:[%s381 + $0xc] sm:$0xf]
        %v969 = vld [vmem:[%s381 + $0x10] sm:$0xf]
        %v970 = vld [vmem:[%s381 + $0x14] sm:$0xf]
        %v971 = vld [vmem:[%s381 + $0x18] sm:$0xf]
        %v972 = vld [vmem:[%s381 + $0x1c] sm:$0xf]
        %v973 = vld [vmem:[%s466] sm:$0x1]
        %v975 = vlaneseq
        %v976 = vshrl.u32 %v975, 7
        %v977 = vsub.s32 0, %v976
        %v978 = vrot.slane %v973, %v977
        %v988 = vunpack.c.l.b16 %v965
        %v989 = vunpack.c.l.b16 %v966
        %v990 = vunpack.c.l.b16 %v967
        %v991 = vunpack.c.l.b16 %v968
        %v992 = vunpack.c.l.b16 %v969
        %v993 = vunpack.c.l.b16 %v970
        %v994 = vunpack.c.l.b16 %v971
        %v995 = vunpack.c.l.b16 %v972
        %v996 = vpack.c.b16 %v989, %v988
        %v997 = vpack.c.b16 %v991, %v990
        %v998 = vpack.c.b16 %v993, %v992
        %v999 = vpack.c.b16 %v995, %v994
        %vm1004 = vcmask 523264
        %v1006 = vsel %vm1004, %v957, 0
        %v1009 = vsel %vm1004, %v958, 0
        %v1012 = vsel %vm1004, %v959, 0
        %v1015 = vsel %vm1004, %v960, 0
        %v1018 = vsel %vm1004, %v961, 0
        %v1021 = vsel %vm1004, %v962, 0
        %v1024 = vsel %vm1004, %v963, 0
        %v1027 = vsel %vm1004, %v964, 0
        %1029 = vmatprep.subr.bf16.mxu0 0
        %1030 = vmatpush1.bf16.msra.mxu0 %v996
        %1031 = vmatprep.subr.bf16.mxu0 0
        %1032 = vmatpush1.bf16.msra.mxu0 %v997
        %1033 = vmatprep.subr.bf16.mxu0 0
        %1034 = vmatpush1.bf16.msra.mxu0 %v998
        %1035 = vmatprep.subr.bf16.mxu0 0
        %1036 = vmatpush1.bf16.msra.mxu0 %v999
        %1037 = vmatprep.subr.bf16.mxu0 0
        %1038 = vmatpush1.bf16.msra.mxu0 0
        %1039 = vmatprep.subr.bf16.mxu0 0
        %1040 = vmatpush1.bf16.msra.mxu0 0
        %1041 = vmatprep.subr.bf16.mxu0 0
        %1042 = vmatpush1.bf16.msra.mxu0 0
        %1043 = vmatprep.subr.bf16.mxu0 0
        %1044 = vmatpush1.bf16.msra.mxu0 0
        %1045 = vmatprep.subr.bf16.mxu0 0
        %1046 = vmatpush1.bf16.msra.mxu0 0
        %1047 = vmatprep.subr.bf16.mxu0 0
        %1048 = vmatpush1.bf16.msra.mxu0 0
        %1049 = vmatprep.subr.bf16.mxu0 0
        %1050 = vmatpush1.bf16.msra.mxu0 0
        %1051 = vmatprep.subr.bf16.mxu0 0
        %1052 = vmatpush1.bf16.msra.mxu0 0
        %1053 = vmatprep.subr.bf16.mxu0 0
        %1054 = vmatpush1.bf16.msra.mxu0 0
        %1055 = vmatprep.subr.bf16.mxu0 0
        %1056 = vmatpush1.bf16.msra.mxu0 0
        %1057 = vmatprep.subr.bf16.mxu0 0
        %1058 = vmatpush1.bf16.msra.mxu0 0
        %1059 = vmatprep.subr.bf16.mxu0 0
        %1060 = vmatpush1.bf16.msra.mxu0 0
        %1061 = vmatprep.mubr.bf16.mxu0 0
        %1062 = vmatmul.mubr.bf16.gmra.mrb[0].mxu0 %v1006
        %v1063 = vpop.f32.mrb[0].mxu0
        %v1064 = vadd.f32 %v978, %v1063
        %v1065 = vpop.f32.mrb[0].mxu0
        %v1066 = vpop.f32.mrb[0].mxu0
        %v1067 = vadd.f32 %v978, %v1066
        %v1068 = vpop.f32.mrb[0].mxu0
        %1069 = vmatprep.mubr.bf16.mxu0 0
        %1070 = vmatmul.mubr.bf16.gmra.mrb[0].mxu0 %v1009
        %v1071 = vpop.f32.mrb[0].mxu0
        %v1072 = vadd.f32 %v978, %v1071
        %v1073 = vpop.f32.mrb[0].mxu0
        %v1074 = vpop.f32.mrb[0].mxu0
        %v1075 = vadd.f32 %v978, %v1074
        %v1076 = vpop.f32.mrb[0].mxu0
        %1077 = vmatprep.mubr.bf16.mxu0 0
        %1078 = vmatmul.mubr.bf16.gmra.mrb[0].mxu0 %v1012
        %v1079 = vpop.f32.mrb[0].mxu0
        %v1080 = vadd.f32 %v978, %v1079
        %v1081 = vpop.f32.mrb[0].mxu0
        %v1082 = vpop.f32.mrb[0].mxu0
        %v1083 = vadd.f32 %v978, %v1082
        %v1084 = vpop.f32.mrb[0].mxu0
        %1085 = vmatprep.mubr.bf16.mxu0 0
        %1086 = vmatmul.mubr.bf16.gmra.mrb[0].mxu0 %v1015
        %v1087 = vpop.f32.mrb[0].mxu0
        %v1088 = vadd.f32 %v978, %v1087
        %v1089 = vpop.f32.mrb[0].mxu0
        %v1090 = vpop.f32.mrb[0].mxu0
        %v1091 = vadd.f32 %v978, %v1090
        %v1092 = vpop.f32.mrb[0].mxu0
        %1093 = vmatprep.mubr.bf16.mxu0 0
        %1094 = vmatmul.mubr.bf16.gmra.mrb[0].mxu0 %v1018
        %v1095 = vpop.f32.mrb[0].mxu0
        %v1096 = vadd.f32 %v978, %v1095
        %v1097 = vpop.f32.mrb[0].mxu0
        %v1098 = vpop.f32.mrb[0].mxu0
        %v1099 = vadd.f32 %v978, %v1098
        %v1100 = vpop.f32.mrb[0].mxu0
        %1101 = vmatprep.mubr.bf16.mxu0 0
        %1102 = vmatmul.mubr.bf16.gmra.mrb[0].mxu0 %v1021
        %v1103 = vpop.f32.mrb[0].mxu0
        %v1104 = vadd.f32 %v978, %v1103
        %v1105 = vpop.f32.mrb[0].mxu0
        %v1106 = vpop.f32.mrb[0].mxu0
        %v1107 = vadd.f32 %v978, %v1106
        %v1108 = vpop.f32.mrb[0].mxu0
        %1109 = vmatprep.mubr.bf16.mxu0 0
        %1110 = vmatmul.mubr.bf16.gmra.mrb[0].mxu0 %v1024
        %v1111 = vpop.f32.mrb[0].mxu0
        %v1112 = vadd.f32 %v978, %v1111
        %v1113 = vpop.f32.mrb[0].mxu0
        %v1114 = vpop.f32.mrb[0].mxu0
        %v1115 = vadd.f32 %v978, %v1114
        %v1116 = vpop.f32.mrb[0].mxu0
        %1117 = vmatprep.mubr.bf16.mxu0 0
        %1118 = vmatmul.mubr.bf16.gmra.mrb[0].mxu0 %v1027
        %v1119 = vpop.f32.mrb[0].mxu0
        %v1120 = vadd.f32 %v978, %v1119
        %v1121 = vpop.f32.mrb[0].mxu0
        %v1122 = vpop.f32.mrb[0].mxu0
        %v1123 = vadd.f32 %v978, %v1122
        %v1124 = vpop.f32.mrb[0].mxu0
        %1125 = vdwg.mxu0
        %v1126 = vlaneseq
        %v1127 = vand.u32 %v1126, 127
        %v1128 = vstv %s30
        %vm1129 = vcmp.eq.s32.totalorder %v1127, %v1128
        %v1130 = vld [vmem:[#allocation2] sm:$0xff]
        %v1131 = vld [vmem:[#allocation2 + $0x8] sm:$0xff]
        %v1132 = vld [vmem:[#allocation2 + $0x10] sm:$0xff]
        %v1133 = vld [vmem:[#allocation2 + $0x18] sm:$0xff]
        %v1134 = vld [vmem:[#allocation2 + $0x20] sm:$0xff]
        %v1135 = vld [vmem:[#allocation2 + $0x28] sm:$0xff]
        %v1136 = vld [vmem:[#allocation2 + $0x30] sm:$0xff]
        %v1137 = vld [vmem:[#allocation2 + $0x38] sm:$0xff]
        %v1138 = vld [vmem:[#allocation2 + $0x40] sm:$0xff]
        %v1139 = vld [vmem:[#allocation2 + $0x48] sm:$0xff]
        %v1140 = vld [vmem:[#allocation2 + $0x50] sm:$0xff]
        %v1141 = vld [vmem:[#allocation2 + $0x58] sm:$0xff]
        %v1142 = vld [vmem:[#allocation2 + $0x60] sm:$0xff]
        %v1143 = vld [vmem:[#allocation2 + $0x68] sm:$0xff]
        %v1144 = vld [vmem:[#allocation2 + $0x70] sm:$0xff]
        %v1145 = vld [vmem:[#allocation2 + $0x78] sm:$0xff]
        %v1146 = vsel %vm1129, %v1130, 0.0
        %v1147 = vsel %vm1129, %v1131, 0.0
        %v1148 = vsel %vm1129, %v1132, 0.0
        %v1149 = vsel %vm1129, %v1133, 0.0
        %v1150 = vsel %vm1129, %v1134, 0.0
        %v1151 = vsel %vm1129, %v1135, 0.0
        %v1152 = vsel %vm1129, %v1136, 0.0
        %v1153 = vsel %vm1129, %v1137, 0.0
        %v1154 = vsel %vm1129, %v1138, 0.0
        %v1155 = vsel %vm1129, %v1139, 0.0
        %v1156 = vsel %vm1129, %v1140, 0.0
        %v1157 = vsel %vm1129, %v1141, 0.0
        %v1158 = vsel %vm1129, %v1142, 0.0
        %v1159 = vsel %vm1129, %v1143, 0.0
        %v1160 = vsel %vm1129, %v1144, 0.0
        %v1161 = vsel %vm1129, %v1145, 0.0
        %1162 = vadd.xlane.f32.xlu0 %v1146
        %v1163 = vpop.xlane.xlu0 %1162
        %1164 = vadd.xlane.f32.xlu0 %v1147
        %v1165 = vpop.xlane.xlu0 %1164
        %1166 = vadd.xlane.f32.xlu0 %v1148
        %v1167 = vpop.xlane.xlu0 %1166
        %1168 = vadd.xlane.f32.xlu0 %v1149
        %v1169 = vpop.xlane.xlu0 %1168
        %1170 = vadd.xlane.f32.xlu0 %v1150
        %v1171 = vpop.xlane.xlu0 %1170
        %1172 = vadd.xlane.f32.xlu0 %v1151
        %v1173 = vpop.xlane.xlu0 %1172
        %1174 = vadd.xlane.f32.xlu0 %v1152
        %v1175 = vpop.xlane.xlu0 %1174
        %1176 = vadd.xlane.f32.xlu0 %v1153
        %v1177 = vpop.xlane.xlu0 %1176
        %1178 = vadd.xlane.f32.xlu0 %v1154
        %v1179 = vpop.xlane.xlu0 %1178
        %1180 = vadd.xlane.f32.xlu0 %v1155
        %v1181 = vpop.xlane.xlu0 %1180
        %1182 = vadd.xlane.f32.xlu0 %v1156
        %v1183 = vpop.xlane.xlu0 %1182
        %1184 = vadd.xlane.f32.xlu0 %v1157
        %v1185 = vpop.xlane.xlu0 %1184
        %1186 = vadd.xlane.f32.xlu0 %v1158
        %v1187 = vpop.xlane.xlu0 %1186
        %1188 = vadd.xlane.f32.xlu0 %v1159
        %v1189 = vpop.xlane.xlu0 %1188
        %1190 = vadd.xlane.f32.xlu0 %v1160
        %v1191 = vpop.xlane.xlu0 %1190
        %1192 = vadd.xlane.f32.xlu0 %v1161
        %v1193 = vpop.xlane.xlu0 %1192
        %v1194 = vmul.f32 %v1163, %v1064
        %v1195 = vmul.f32 %v1165, %v1067
        %v1196 = vmul.f32 %v1167, %v1072
        %v1197 = vmul.f32 %v1169, %v1075
        %v1198 = vmul.f32 %v1171, %v1080
        %v1199 = vmul.f32 %v1173, %v1083
        %v1200 = vmul.f32 %v1175, %v1088
        %v1201 = vmul.f32 %v1177, %v1091
        %v1202 = vmul.f32 %v1179, %v1096
        %v1203 = vmul.f32 %v1181, %v1099
        %v1204 = vmul.f32 %v1183, %v1104
        %v1205 = vmul.f32 %v1185, %v1107
        %v1206 = vmul.f32 %v1187, %v1112
        %v1207 = vmul.f32 %v1189, %v1115
        %v1208 = vmul.f32 %v1191, %v1120
        %v1209 = vmul.f32 %v1193, %v1123
        // Predicated region
        $region98: #{tpu_custom_call.1} parent=80 // pred_check
          %p1210 = pneg %p473
        $region99: #{tpu_custom_call.1} parent=80 // pred_check_branch
          %1212 = sbr.rel (%p1210) target = $region101
        $region100: #{tpu_custom_call.1} parent=80 // pred_region
          %1213 = vst [vmem:[#allocation3] sm:$0xff] %v1194
          %1214 = vst [vmem:[#allocation3 + $0x8] sm:$0xff] %v1195
          %1215 = vst [vmem:[#allocation3 + $0x10] sm:$0xff] %v1196
          %1216 = vst [vmem:[#allocation3 + $0x18] sm:$0xff] %v1197
          %1217 = vst [vmem:[#allocation3 + $0x20] sm:$0xff] %v1198
          %1218 = vst [vmem:[#allocation3 + $0x28] sm:$0xff] %v1199
          %1219 = vst [vmem:[#allocation3 + $0x30] sm:$0xff] %v1200
          %1220 = vst [vmem:[#allocation3 + $0x38] sm:$0xff] %v1201
          %1221 = vst [vmem:[#allocation3 + $0x40] sm:$0xff] %v1202
          %1222 = vst [vmem:[#allocation3 + $0x48] sm:$0xff] %v1203
          %1223 = vst [vmem:[#allocation3 + $0x50] sm:$0xff] %v1204
          %1224 = vst [vmem:[#allocation3 + $0x58] sm:$0xff] %v1205
          %1225 = vst [vmem:[#allocation3 + $0x60] sm:$0xff] %v1206
          %1226 = vst [vmem:[#allocation3 + $0x68] sm:$0xff] %v1207
          %1227 = vst [vmem:[#allocation3 + $0x70] sm:$0xff] %v1208
          %1228 = vst [vmem:[#allocation3 + $0x78] sm:$0xff] %v1209
        $region101: #{tpu_custom_call.1} parent=80 // pred_fallthru
          _
        %p1229 = scmp.gt.s32.totalorder %s30, 0
        // Predicated region
        $region102: #{tpu_custom_call.1} parent=80 // pred_check
          %p1230 = pneg %p1229
        $region103: #{tpu_custom_call.1} parent=80 // pred_check_branch
          %1232 = sbr.rel (%p1230) target = $region105
        $region104: #{tpu_custom_call.1} parent=80 // pred_region
          %v1233 = vld [vmem:[#allocation3] sm:$0xff]
          %v1234 = vld [vmem:[#allocation3 + $0x8] sm:$0xff]
          %v1235 = vld [vmem:[#allocation3 + $0x10] sm:$0xff]
          %v1236 = vld [vmem:[#allocation3 + $0x18] sm:$0xff]
          %v1237 = vld [vmem:[#allocation3 + $0x20] sm:$0xff]
          %v1238 = vld [vmem:[#allocation3 + $0x28] sm:$0xff]
          %v1239 = vld [vmem:[#allocation3 + $0x30] sm:$0xff]
          %v1240 = vld [vmem:[#allocation3 + $0x38] sm:$0xff]
          %v1241 = vld [vmem:[#allocation3 + $0x40] sm:$0xff]
          %v1242 = vld [vmem:[#allocation3 + $0x48] sm:$0xff]
          %v1243 = vld [vmem:[#allocation3 + $0x50] sm:$0xff]
          %v1244 = vld [vmem:[#allocation3 + $0x58] sm:$0xff]
          %v1245 = vld [vmem:[#allocation3 + $0x60] sm:$0xff]
          %v1246 = vld [vmem:[#allocation3 + $0x68] sm:$0xff]
          %v1247 = vld [vmem:[#allocation3 + $0x70] sm:$0xff]
          %v1248 = vld [vmem:[#allocation3 + $0x78] sm:$0xff]
          %v1249 = vadd.f32 %v1233, %v1194
          %v1250 = vadd.f32 %v1234, %v1195
          %v1251 = vadd.f32 %v1235, %v1196
          %v1252 = vadd.f32 %v1236, %v1197
          %v1253 = vadd.f32 %v1237, %v1198
          %v1254 = vadd.f32 %v1238, %v1199
          %v1255 = vadd.f32 %v1239, %v1200
          %v1256 = vadd.f32 %v1240, %v1201
          %v1257 = vadd.f32 %v1241, %v1202
          %v1258 = vadd.f32 %v1242, %v1203
          %v1259 = vadd.f32 %v1243, %v1204
          %v1260 = vadd.f32 %v1244, %v1205
          %v1261 = vadd.f32 %v1245, %v1206
          %v1262 = vadd.f32 %v1246, %v1207
          %v1263 = vadd.f32 %v1247, %v1208
          %v1264 = vadd.f32 %v1248, %v1209
          %1265 = vst [vmem:[#allocation3] sm:$0xff] %v1249
          %1266 = vst [vmem:[#allocation3 + $0x8] sm:$0xff] %v1250
          %1267 = vst [vmem:[#allocation3 + $0x10] sm:$0xff] %v1251
          %1268 = vst [vmem:[#allocation3 + $0x18] sm:$0xff] %v1252
          %1269 = vst [vmem:[#allocation3 + $0x20] sm:$0xff] %v1253
          %1270 = vst [vmem:[#allocation3 + $0x28] sm:$0xff] %v1254
          %1271 = vst [vmem:[#allocation3 + $0x30] sm:$0xff] %v1255
          %1272 = vst [vmem:[#allocation3 + $0x38] sm:$0xff] %v1256
          %1273 = vst [vmem:[#allocation3 + $0x40] sm:$0xff] %v1257
          %1274 = vst [vmem:[#allocation3 + $0x48] sm:$0xff] %v1258
          %1275 = vst [vmem:[#allocation3 + $0x50] sm:$0xff] %v1259
          %1276 = vst [vmem:[#allocation3 + $0x58] sm:$0xff] %v1260
          %1277 = vst [vmem:[#allocation3 + $0x60] sm:$0xff] %v1261
          %1278 = vst [vmem:[#allocation3 + $0x68] sm:$0xff] %v1262
          %1279 = vst [vmem:[#allocation3 + $0x70] sm:$0xff] %v1263
          %1280 = vst [vmem:[#allocation3 + $0x78] sm:$0xff] %v1264
        $region105: #{tpu_custom_call.1} parent=80 // pred_fallthru
          _
        %p1281 = scmp.eq.s32.totalorder %s30, 3
        // Predicated region
        $region106: #{tpu_custom_call.1} parent=80 // pred_check
          %p1282 = pneg %p1281
        $region107: #{tpu_custom_call.1} parent=80 // pred_check_branch
          %1284 = sbr.rel (%p1282) target = $region109
        $region108: #{tpu_custom_call.1} parent=80 // pred_region
          %v1285 = vld [vmem:[#allocation3] sm:$0xff]
          %v1286 = vld [vmem:[#allocation3 + $0x8] sm:$0xff]
          %v1287 = vld [vmem:[#allocation3 + $0x10] sm:$0xff]
          %v1288 = vld [vmem:[#allocation3 + $0x18] sm:$0xff]
          %v1289 = vld [vmem:[#allocation3 + $0x20] sm:$0xff]
          %v1290 = vld [vmem:[#allocation3 + $0x28] sm:$0xff]
          %v1291 = vld [vmem:[#allocation3 + $0x30] sm:$0xff]
          %v1292 = vld [vmem:[#allocation3 + $0x38] sm:$0xff]
          %v1293 = vld [vmem:[#allocation3 + $0x40] sm:$0xff]
          %v1294 = vld [vmem:[#allocation3 + $0x48] sm:$0xff]
          %v1295 = vld [vmem:[#allocation3 + $0x50] sm:$0xff]
          %v1296 = vld [vmem:[#allocation3 + $0x58] sm:$0xff]
          %v1297 = vld [vmem:[#allocation3 + $0x60] sm:$0xff]
          %v1298 = vld [vmem:[#allocation3 + $0x68] sm:$0xff]
          %v1299 = vld [vmem:[#allocation3 + $0x70] sm:$0xff]
          %v1300 = vld [vmem:[#allocation3 + $0x78] sm:$0xff]
          %1301 = vst [vmem:[%s428] sm:$0xff] %v1285
          %1302 = vst [vmem:[%s428 + $0x8] sm:$0xff] %v1286
          %1303 = vst [vmem:[%s428 + $0x10] sm:$0xff] %v1287
          %1304 = vst [vmem:[%s428 + $0x18] sm:$0xff] %v1288
          %1305 = vst [vmem:[%s428 + $0x20] sm:$0xff] %v1289
          %1306 = vst [vmem:[%s428 + $0x28] sm:$0xff] %v1290
          %1307 = vst [vmem:[%s428 + $0x30] sm:$0xff] %v1291
          %1308 = vst [vmem:[%s428 + $0x38] sm:$0xff] %v1292
          %1309 = vst [vmem:[%s428 + $0x40] sm:$0xff] %v1293
          %1310 = vst [vmem:[%s428 + $0x48] sm:$0xff] %v1294
          %1311 = vst [vmem:[%s428 + $0x50] sm:$0xff] %v1295
          %1312 = vst [vmem:[%s428 + $0x58] sm:$0xff] %v1296
          %1313 = vst [vmem:[%s428 + $0x60] sm:$0xff] %v1297
          %1314 = vst [vmem:[%s428 + $0x68] sm:$0xff] %v1298
          %1315 = vst [vmem:[%s428 + $0x70] sm:$0xff] %v1299
          %1316 = vst [vmem:[%s428 + $0x78] sm:$0xff] %v1300
        $region109: #{tpu_custom_call.1} parent=80 // pred_fallthru
          _
        %s1317 = sand.u32 %s191, 1
        %s1318 = scalar_lea.sflag [#allocation6], %s1317
        %s1319 = sand.u32 %s191, 1
        %s1320 = smul.addr %s1319, 128
        %s1321 = scalar_lea.vmem [#allocation5], %s1320
        %s1322 = sand.u32 %s217, 1
        %s1323 = scalar_lea.sflag [#allocation8], %s1322
        %s1324 = sand.u32 %s217, 1
        %s1325 = smul.addr %s1324, 8
        %s1326 = scalar_lea.vmem [#allocation7], %s1325
        // Predicated region
        $region110: #{tpu_custom_call.1} parent=80 // pred_check
          %p1327 = pneg %p201
        $region111: #{tpu_custom_call.1} parent=80 // pred_check_branch
          %1329 = sbr.rel (%p1327) target = $region113
        $region112: #{tpu_custom_call.1} parent=80 // pred_region
          %s1330 = smul.u32 16, %s29
          %s1331 = ssub.s32 25, %s1330
          %p1332 = scmp.lt.s32.totalorder %s1331, 16
          %s1333 = scalar_select %p1332, %s1331, 16
          %s1334 = smul.u32 128, %s1333
          %s1336 = ssub.s32 2048, %s1334
          %1337 = vsyncadd %s1318, %s1336
          %p1338 = scmp.ne.s32.totalorder 0, %s1334
          %s1339 = smul.addr %s1330, 128
          %s1340 = scalar_lea.hbm %s6, %s1339
          %s1341 = smul.u32 8, %s1333
          %s1342 = sshll.u32 %s1321, 4
          %s1343 = int_to_ptr.vmem [resolvable:$true] %s1342
          %s1344 = sshll.u32 %s1341, 4
          %1348 = dma.vmem_to_hbm [thread:$0]  (%p1338), %s1343, %s1344, %s1340, %s1318, 128, 128, 8
        $region113: #{tpu_custom_call.1} parent=80 // pred_fallthru
          _
        // Predicated region
        $region114: #{tpu_custom_call.1} parent=80 // pred_check
          %p1349 = pneg %p227
        $region115: #{tpu_custom_call.1} parent=80 // pred_check_branch
          %1351 = sbr.rel (%p1349) target = $region117
        $region116: #{tpu_custom_call.1} parent=80 // pred_region
          %s1353 = ssub.s32 128, 128
          %1354 = vsyncadd %s1323, %s1353
          %s1355 = smul.addr %s29, 128
          %s1356 = scalar_lea.hbm %s7, %s1355
          %s1358 = sshll.u32 %s1326, 4
          %s1359 = int_to_ptr.vmem [resolvable:$true] %s1358
          %1361 = dma.vmem_to_hbm [thread:$0]  %s1359, 128, %s1356, %s1323
        $region117: #{tpu_custom_call.1} parent=80 // pred_fallthru
          _
      $region81: #{tpu_custom_call.1} parent=5 // pred_fallthru
        _
      %p1362 = scmp.le.s32.totalorder 2, %s20
      // Predicated region
      $region118: #{tpu_custom_call.1} parent=5 // pred_check
        %p1363 = pneg %p1362
      $region119: #{tpu_custom_call.1} parent=5 // pred_check_branch
        %1365 = sbr.rel (%p1363) target = $region121
      $region120: #{tpu_custom_call.1} parent=5 // pred_region
        %s1366 = ssub.s32 %s20, 2
        // Predicated region
        $region122: #{tpu_custom_call.1} parent=120 // pred_check
          %p1367 = pneg %p207
        $region123: #{tpu_custom_call.1} parent=120 // pred_check_branch
          %1369 = sbr.rel (%p1367) target = $region125
        $region124: #{tpu_custom_call.1} parent=120 // pred_region
          %s1370 = sand.u32 %s192, 1
          %s1371 = scalar_lea.sflag [#allocation6], %s1370
          %s1372 = sand.u32 %s192, 1
          %s1373 = smul.addr %s1372, 128
          %s1374 = scalar_lea.vmem [#allocation5], %s1373
          %1375 = dma.done %s1371, 2048
        $region125: #{tpu_custom_call.1} parent=120 // pred_fallthru
          _
        // Predicated region
        $region126: #{tpu_custom_call.1} parent=120 // pred_check
          %p1376 = pneg %p233
        $region127: #{tpu_custom_call.1} parent=120 // pred_check_branch
          %1378 = sbr.rel (%p1376) target = $region129
        $region128: #{tpu_custom_call.1} parent=120 // pred_region
          %s1379 = sand.u32 %s218, 1
          %s1380 = scalar_lea.sflag [#allocation8], %s1379
          %s1381 = sand.u32 %s218, 1
          %s1382 = smul.addr %s1381, 8
          %s1383 = scalar_lea.vmem [#allocation7], %s1382
          %1384 = dma.done %s1380, 128
        $region129: #{tpu_custom_call.1} parent=120 // pred_fallthru
          _
      $region121: #{tpu_custom_call.1} parent=5 // pred_fallthru
        _
    $region6: #{tpu_custom_call.1} parent=1 // loop_footer
      %s24 = sadd.s32 1, %s20
    $region7: #{tpu_custom_call.1} parent=1 // loop_footer_branch
      %19 = sbr.rel target = $region3
    $region8: #{tpu_custom_call.1} parent=1 // loop_exit
      _
    %1385 = vsyncpa [#allocation6], 1
    %s1386 = scalar_lea.sflag [#allocation6], 1
    %1387 = vsyncpa %s1386, 1
    %1388 = vsyncpa [#allocation8], 1
    %s1389 = scalar_lea.sflag [#allocation8], 1
    %1390 = vsyncpa %s1389, 1

</llo_original>
